<compile_context>
chip_gen: v6e
topology: v6e:2x2x1
jax: 0.10.0
libtpu: 0.0.40
codegen_flags: <defaults>
</compile_context>

<pallas_src>
import functools

import numpy as np
import jax
import jax.numpy as jnp
from jax.experimental import pallas as pl
from jax.experimental.pallas import tpu as pltpu


# ----------------------------------------------------------------------------
# Fused kernel
# ----------------------------------------------------------------------------

def _ht2iht_kernel(x_ref, vs_ref, vt_ref, dww_ref, dwb_ref, dwmask_ref,
                   wa_ref, ta_ref, wb_ref, tb_ref, m3_ref, o_ref,
                   *, H, W, KH):
    """Fused HT -> dwconv(9,1)+ReLU -> 2x(conv3x3+BN+ReLU) -> IHT.

    Activations live as a lane-dense (B*C, H*W) f32 slab.  A spatial shift of
    (dy, dx) is a pltpu.roll of dy*W+dx lanes; wrapped lanes are zeroed with
    host-prebuilt edge masks (dwmask for the (9,1) stencil, m3 for the 3x3).
    """
    f32 = jnp.float32
    bf16 = jnp.bfloat16
    HW = H * W

    # ---- HT: relu(x) @ (V / max(r,c))  (scale folded into vs host-side) ---- MXU bf16
    ht = jnp.dot(jnp.maximum(x_ref[...], 0.0).astype(bf16), vs_ref[...],
                 preferred_element_type=f32)                           # (BC, HW) f32

    # ---- conv1: depthwise (9,1), pad (4,0), bias, ReLU ---------------------- VPU
    acc = jnp.zeros_like(ht)
    for k in range(KH):
        off = (k - KH // 2) * W
        if off == 0:
            tap = ht
        else:
            tap = pltpu.roll(ht, shift=(-off) % HW, axis=1) * dwmask_ref[k]
        acc = acc + dww_ref[:, k:k + 1] * tap
    out = jnp.maximum(acc + dwb_ref[...], 0.0)

    # ---- convs: 2 x [3x3 conv + folded BatchNorm + ReLU] --------------------
    # Per block: build the 9 shifted+masked taps, stack them along K (9*BC),
    # then a single block-diagonal-over-batch channel-mix matmul on the MXU.
    # BN scale is folded into the weight matrix; BN shift + conv bias into tcol.
    for wref, tref in ((wa_ref, ta_ref), (wb_ref, tb_ref)):
        taps = []
        for t in range(9):
            oy, ox = t // 3 - 1, t % 3 - 1
            off = oy * W + ox
            if off == 0:
                taps.append(out)
            else:
                taps.append(pltpu.roll(out, shift=(-off) % HW, axis=1) * m3_ref[t])
        stacked = jnp.concatenate(taps, axis=0)                         # (9*BC, HW)
        mix = jnp.dot(wref[...], stacked, preferred_element_type=f32)   # (BC, HW)
        out = jnp.maximum(mix + tref[...], 0.0)

    # ---- IHT: out @ V.T ------------------------------------------------------ MXU bf16
    # (out is already post-ReLU, so the module's extra ReLU is a no-op.)
    o_ref[...] = jnp.dot(out.astype(bf16), vt_ref[...],
                         preferred_element_type=f32).astype(o_ref.dtype)


# ----------------------------------------------------------------------------
# Host-side (one-time) parameter prep + jitted forward
# ----------------------------------------------------------------------------

def make_ht2iht(vote_index, batch, conv1_w, conv1_b,
                convA_w, convA_b, convB_w, convB_b,
                bn_gamma, bn_beta, bn_mean, bn_var, eps=1e-5):
    r, c, h, w = vote_index.shape
    C, KH = conv1_w.shape
    B = int(batch)
    BC = B * C
    HW = h * w
    norm = float(max(r, c))

    # Vote tables in bf16: values are exactly 0 or 1/max(r,c) -> lossless cast.
    V = vote_index.reshape(r * c, HW).astype(jnp.float32)
    vs = (V / norm).astype(jnp.bfloat16)          # (r*c, h*w)
    vt = V.T.astype(jnp.bfloat16)                 # (h*w, r*c)

    # Depthwise (9,1) taps / bias, prebroadcast to the (b, c) row ordering.
    dww = jnp.tile(conv1_w.astype(jnp.float32), (B, 1))                 # (BC, KH)
    dwb = jnp.tile(conv1_b.astype(jnp.float32), (B,)).reshape(BC, 1)    # (BC, 1)

    # Fold BatchNorm (eval mode) into the 3x3 weights (scale) and a per-row
    # shift column; build the stacked (BC, 9*BC) channel-mix matrix per block.
    # TODO(synk): BatchNorm2d evaluated with running stats only (train-mode
    #             batch statistics are not reproduced in-kernel).
    eye_b = jnp.eye(B, dtype=jnp.float32)
    s_bn = bn_gamma.astype(jnp.float32) / jnp.sqrt(bn_var.astype(jnp.float32) + eps)

    def stacked_mix(wc, bias):
        wcs = wc.astype(jnp.float32) * s_bn[:, None, None, None]         # fold scale per out-ch
        blocks = [jnp.kron(eye_b, wcs[:, :, t // 3, t % 3]) for t in range(9)]
        wmat = jnp.concatenate(blocks, axis=1)                           # (BC, 9*BC)
        shift = (bias.astype(jnp.float32) - bn_mean.astype(jnp.float32)) * s_bn \
            + bn_beta.astype(jnp.float32)
        tcol = jnp.tile(shift, (B,)).reshape(BC, 1)                      # (BC, 1)
        return wmat, tcol

    wa, ta = stacked_mix(convA_w, convA_b)
    wb, tb = stacked_mix(convB_w, convB_b)

    # Edge-validity masks for the rolled taps (zero out wrapped lanes).
    ys = jnp.arange(HW) // w
    xs = jnp.arange(HW) % w
    dwmask = jnp.stack([
        (((ys + k - KH // 2) >= 0) & ((ys + k - KH // 2) < h))
        .astype(jnp.float32).reshape(1, HW) for k in range(KH)])          # (KH, 1, HW)
    m3 = jnp.stack([
        (((ys + t // 3 - 1) >= 0) & ((ys + t // 3 - 1) < h) &
         ((xs + t % 3 - 1) >= 0) & ((xs + t % 3 - 1) < w))
        .astype(jnp.float32).reshape(1, HW) for t in range(9)])           # (9, 1, HW)

    kern = functools.partial(_ht2iht_kernel, H=h, W=w, KH=KH)
    call = pl.pallas_call(
        kern,
        out_shape=jax.ShapeDtypeStruct((BC, r * c), jnp.float32),
    )

    @jax.jit
    def forward(x):
        assert x.shape == (B, C, r, c), x.shape
        out = call(x.reshape(BC, r * c).astype(jnp.float32),
                   vs, vt, dww, dwb, dwmask, wa, ta, wb, tb, m3)
        return out.reshape(B, C, r, c)

    return forward


# ----------------------------------------------------------------------------
# Pure-JAX reference (matches PyTorch semantics) for correctness checking
# ----------------------------------------------------------------------------

def reference_forward(vote_index, x, conv1_w, conv1_b, convA_w, convA_b,
                      convB_w, convB_b, g, bta, mu, var, eps=1e-5):
    r, c, h, w = vote_index.shape
    B, C = x.shape[:2]
    KH = conv1_w.shape[1]
    hp = jax.lax.Precision.HIGHEST
    V = vote_index.reshape(r * c, h * w).astype(jnp.float32)

    ht = jnp.matmul(jax.nn.relu(x.reshape(B * C, r * c)), V, precision=hp) / max(r, c)
    out = ht.reshape(B, C, h, w)

    dw = conv1_w.reshape(C, 1, KH, 1)
    out = jax.lax.conv_general_dilated(
        out, dw, (1, 1), ((KH // 2, KH // 2), (0, 0)),
        dimension_numbers=("NCHW", "OIHW", "NCHW"),
        feature_group_count=C, precision=hp)
    out = jax.nn.relu(out + conv1_b.reshape(1, C, 1, 1))

    def block(a, wc, bc):
        o = jax.lax.conv_general_dilated(
            a, wc, (1, 1), ((1, 1), (1, 1)),
            dimension_numbers=("NCHW", "OIHW", "NCHW"), precision=hp)
        o = o + bc.reshape(1, -1, 1, 1)
        s = (g / jnp.sqrt(var + eps)).reshape(1, -1, 1, 1)
        o = (o - mu.reshape(1, -1, 1, 1)) * s + bta.reshape(1, -1, 1, 1)
        return jax.nn.relu(o)

    out = block(out, convA_w, convA_b)
    out = block(out, convB_w, convB_b)

    iht = jnp.matmul(jax.nn.relu(out).reshape(B * C, h * w), V.T, precision=hp)
    return iht.reshape(B, C, r, c)


# ----------------------------------------------------------------------------
# Parameter construction (deterministic, in-script)
# ----------------------------------------------------------------------------

def gaussian_2nd_deriv_filters(inplanes, filtersize=4, seed=0):
    # Analytic second-derivative-of-Gaussian taps, normalized like the PyTorch init:
    #   y = -y / sum(|y|), sigma ~ U(1, 2.5) per channel (deterministic seed).
    # TODO(synk): scipy.ndimage.gaussian_filter boundary reflection not reproduced;
    #             analytic 2nd-derivative kernel over offsets [-4, 4] is used instead.
    rng = np.random.RandomState(seed)
    t = np.arange(-filtersize, filtersize + 1, dtype=np.float64)
    filt = []
    for _ in range(inplanes):
        sigma = rng.uniform(1.0, 2.5)
        gauss = np.exp(-t ** 2 / (2.0 * sigma ** 2))
        y = (t ** 2 / sigma ** 4 - 1.0 / sigma ** 2) * gauss
        y = -y / np.sum(np.abs(y))
        filt.append(y)
    return np.stack(filt).astype(np.float32)  # (C, 2*filtersize+1)


# ----------------------------------------------------------------------------
# Main
# ----------------------------------------------------------------------------

if __name__ == "__main__":
    B, C = 2, 4                     # batch, inplanes
    r, c, h, w = 16, 16, 16, 16     # vote_index dims (image r x c, Hough space h x w)

    key = jax.random.PRNGKey(0)
    k1, k2, k3, k4, k5, k6, k7 = jax.random.split(key, 7)

    # Synthetic (deterministic) Hough voting table and input image.
    vote_index = (jax.random.uniform(k1, (r, c, h, w)) < 0.1).astype(jnp.float32)
    x = jax.random.normal(k2, (B, C, r, c), jnp.float32)

    # conv1: depthwise (9,1) taps from the Gaussian-2nd-derivative init, plus bias.
    conv1_w = jnp.asarray(gaussian_2nd_deriv_filters(C, filtersize=4, seed=0))  # (C, 9)
    conv1_b = 0.01 * jax.random.normal(k3, (C,), jnp.float32)

    # convs: two Conv2d(C, C, 3, 1, 1) with bias, BatchNorm2d at default init (eval mode).
    convA_w = 0.1 * jax.random.normal(k4, (C, C, 3, 3), jnp.float32)
    convA_b = 0.01 * jax.random.normal(k5, (C,), jnp.float32)
    convB_w = 0.1 * jax.random.normal(k6, (C, C, 3, 3), jnp.float32)
    convB_b = 0.01 * jax.random.normal(k7, (C,), jnp.float32)

    gamma = jnp.ones((C,), jnp.float32)
    beta = jnp.zeros((C,), jnp.float32)
    run_mean = jnp.zeros((C,), jnp.float32)
    run_var = jnp.ones((C,), jnp.float32)

    forward = make_ht2iht(vote_index, B, conv1_w, conv1_b,
                          convA_w, convA_b, convB_w, convB_b,
                          gamma, beta, run_mean, run_var)

    out = jax.block_until_ready(forward(x))

    ref = jax.block_until_ready(
        reference_forward(vote_index, x, conv1_w, conv1_b, convA_w, convA_b,
                          convB_w, convB_b, gamma, beta, run_mean, run_var))

    assert out.shape == (B, C, r, c), out.shape
    assert bool(jnp.all(jnp.isfinite(out)))
    np.testing.assert_allclose(np.asarray(out), np.asarray(ref), rtol=2e-2, atol=2e-2)
    print("KERNEL_OK")
</pallas_src>

<mosaic_0001>
module attributes {stable_mosaic.version = 11 : i64} {
  func.func @_ht2iht_kernel(%arg0: memref<8x256xf32, #tpu.memory_space<vmem>>, %arg1: memref<256x256xbf16, #tpu.memory_space<vmem>>, %arg2: memref<256x256xbf16, #tpu.memory_space<vmem>>, %arg3: memref<8x9xf32, #tpu.memory_space<vmem>>, %arg4: memref<8x1xf32, #tpu.memory_space<vmem>>, %arg5: memref<9x1x256xf32, #tpu.memory_space<vmem>>, %arg6: memref<8x72xf32, #tpu.memory_space<vmem>>, %arg7: memref<8x1xf32, #tpu.memory_space<vmem>>, %arg8: memref<8x72xf32, #tpu.memory_space<vmem>>, %arg9: memref<8x1xf32, #tpu.memory_space<vmem>>, %arg10: memref<9x1x256xf32, #tpu.memory_space<vmem>>, %arg11: memref<8x256xf32, #tpu.memory_space<vmem>>) attributes {dimension_semantics = [], scalar_prefetch = 0 : i64, scratch_operands = 0 : i64, tpu.core_type = #tpu.core_type<tc>} {
    %c0 = arith.constant 0 : index
    %c0_0 = arith.constant 0 : index
    %0 = vector.load %arg0[%c0, %c0_0] : memref<8x256xf32, #tpu.memory_space<vmem>>, vector<8x256xf32>
    %cst = arith.constant 0.000000e+00 : f32
    %1 = vector.broadcast %cst : f32 to vector<8x256xf32>
    %2 = arith.maximumf %0, %1 : vector<8x256xf32>
    %3 = arith.truncf %2 : vector<8x256xf32> to vector<8x256xbf16>
    %c0_1 = arith.constant 0 : index
    %c0_2 = arith.constant 0 : index
    %4 = vector.load %arg1[%c0_1, %c0_2] : memref<256x256xbf16, #tpu.memory_space<vmem>>, vector<256x256xbf16>
    %cst_3 = arith.constant dense<0.000000e+00> : vector<8x256xf32>
    %5 = tpu.matmul %3, %4, %cst_3 {dimension_numbers = #tpu.dot_dimension_numbers<[1], [0], [0], [1], [0, 0, 1, 1], [], []>} : vector<8x256xbf16>, vector<256x256xbf16>, vector<8x256xf32> -> vector<8x256xf32>
    %cst_4 = arith.constant 0.000000e+00 : f32
    %6 = vector.broadcast %cst_4 : f32 to vector<8x256xf32>
    %c64_i32 = arith.constant 64 : i32
    %7 = tpu.dynamic_rotate %5 by %c64_i32 dim 1 : vector<8x256xf32>, i32 -> vector<8x256xf32>
    %c0_5 = arith.constant 0 : index
    %c0_6 = arith.constant 0 : index
    %c0_7 = arith.constant 0 : index
    %8 = vector.load %arg5[%c0_5, %c0_6, %c0_7] : memref<9x1x256xf32, #tpu.memory_space<vmem>>, vector<1x1x256xf32>
    %9 = vector.shape_cast %8 : vector<1x1x256xf32> to vector<1x256xf32>
    %10 = vector.broadcast %9 : vector<1x256xf32> to vector<8x256xf32>
    %11 = arith.mulf %7, %10 : vector<8x256xf32>
    %c0_8 = arith.constant 0 : index
    %c0_9 = arith.constant 0 : index
    %12 = vector.load %arg3[%c0_8, %c0_9] : memref<8x9xf32, #tpu.memory_space<vmem>>, vector<8x1xf32>
    %13 = vector.broadcast %12 : vector<8x1xf32> to vector<8x256xf32>
    %14 = arith.mulf %13, %11 : vector<8x256xf32>
    %15 = arith.addf %6, %14 : vector<8x256xf32>
    %c48_i32 = arith.constant 48 : i32
    %16 = tpu.dynamic_rotate %5 by %c48_i32 dim 1 : vector<8x256xf32>, i32 -> vector<8x256xf32>
    %c1 = arith.constant 1 : index
    %c0_10 = arith.constant 0 : index
    %c0_11 = arith.constant 0 : index
    %17 = vector.load %arg5[%c1, %c0_10, %c0_11] : memref<9x1x256xf32, #tpu.memory_space<vmem>>, vector<1x1x256xf32>
    %18 = vector.shape_cast %17 : vector<1x1x256xf32> to vector<1x256xf32>
    %19 = vector.broadcast %18 : vector<1x256xf32> to vector<8x256xf32>
    %20 = arith.mulf %16, %19 : vector<8x256xf32>
    %c0_12 = arith.constant 0 : index
    %c1_13 = arith.constant 1 : index
    %21 = vector.load %arg3[%c0_12, %c1_13] : memref<8x9xf32, #tpu.memory_space<vmem>>, vector<8x1xf32>
    %22 = vector.broadcast %21 : vector<8x1xf32> to vector<8x256xf32>
    %23 = arith.mulf %22, %20 : vector<8x256xf32>
    %24 = arith.addf %15, %23 : vector<8x256xf32>
    %c32_i32 = arith.constant 32 : i32
    %25 = tpu.dynamic_rotate %5 by %c32_i32 dim 1 : vector<8x256xf32>, i32 -> vector<8x256xf32>
    %c2 = arith.constant 2 : index
    %c0_14 = arith.constant 0 : index
    %c0_15 = arith.constant 0 : index
    %26 = vector.load %arg5[%c2, %c0_14, %c0_15] : memref<9x1x256xf32, #tpu.memory_space<vmem>>, vector<1x1x256xf32>
    %27 = vector.shape_cast %26 : vector<1x1x256xf32> to vector<1x256xf32>
    %28 = vector.broadcast %27 : vector<1x256xf32> to vector<8x256xf32>
    %29 = arith.mulf %25, %28 : vector<8x256xf32>
    %c0_16 = arith.constant 0 : index
    %c2_17 = arith.constant 2 : index
    %30 = vector.load %arg3[%c0_16, %c2_17] : memref<8x9xf32, #tpu.memory_space<vmem>>, vector<8x1xf32>
    %31 = vector.broadcast %30 : vector<8x1xf32> to vector<8x256xf32>
    %32 = arith.mulf %31, %29 : vector<8x256xf32>
    %33 = arith.addf %24, %32 : vector<8x256xf32>
    %c16_i32 = arith.constant 16 : i32
    %34 = tpu.dynamic_rotate %5 by %c16_i32 dim 1 : vector<8x256xf32>, i32 -> vector<8x256xf32>
    %c3 = arith.constant 3 : index
    %c0_18 = arith.constant 0 : index
    %c0_19 = arith.constant 0 : index
    %35 = vector.load %arg5[%c3, %c0_18, %c0_19] : memref<9x1x256xf32, #tpu.memory_space<vmem>>, vector<1x1x256xf32>
    %36 = vector.shape_cast %35 : vector<1x1x256xf32> to vector<1x256xf32>
    %37 = vector.broadcast %36 : vector<1x256xf32> to vector<8x256xf32>
    %38 = arith.mulf %34, %37 : vector<8x256xf32>
    %c0_20 = arith.constant 0 : index
    %c3_21 = arith.constant 3 : index
    %39 = vector.load %arg3[%c0_20, %c3_21] : memref<8x9xf32, #tpu.memory_space<vmem>>, vector<8x1xf32>
    %40 = vector.broadcast %39 : vector<8x1xf32> to vector<8x256xf32>
    %41 = arith.mulf %40, %38 : vector<8x256xf32>
    %42 = arith.addf %33, %41 : vector<8x256xf32>
    %c0_22 = arith.constant 0 : index
    %c4 = arith.constant 4 : index
    %43 = vector.load %arg3[%c0_22, %c4] : memref<8x9xf32, #tpu.memory_space<vmem>>, vector<8x1xf32>
    %44 = vector.broadcast %43 : vector<8x1xf32> to vector<8x256xf32>
    %45 = arith.mulf %44, %5 : vector<8x256xf32>
    %46 = arith.addf %42, %45 : vector<8x256xf32>
    %c240_i32 = arith.constant 240 : i32
    %47 = tpu.dynamic_rotate %5 by %c240_i32 dim 1 : vector<8x256xf32>, i32 -> vector<8x256xf32>
    %c5 = arith.constant 5 : index
    %c0_23 = arith.constant 0 : index
    %c0_24 = arith.constant 0 : index
    %48 = vector.load %arg5[%c5, %c0_23, %c0_24] : memref<9x1x256xf32, #tpu.memory_space<vmem>>, vector<1x1x256xf32>
    %49 = vector.shape_cast %48 : vector<1x1x256xf32> to vector<1x256xf32>
    %50 = vector.broadcast %49 : vector<1x256xf32> to vector<8x256xf32>
    %51 = arith.mulf %47, %50 : vector<8x256xf32>
    %c0_25 = arith.constant 0 : index
    %c5_26 = arith.constant 5 : index
    %52 = vector.load %arg3[%c0_25, %c5_26] : memref<8x9xf32, #tpu.memory_space<vmem>>, vector<8x1xf32>
    %53 = vector.broadcast %52 : vector<8x1xf32> to vector<8x256xf32>
    %54 = arith.mulf %53, %51 : vector<8x256xf32>
    %55 = arith.addf %46, %54 : vector<8x256xf32>
    %c224_i32 = arith.constant 224 : i32
    %56 = tpu.dynamic_rotate %5 by %c224_i32 dim 1 : vector<8x256xf32>, i32 -> vector<8x256xf32>
    %c6 = arith.constant 6 : index
    %c0_27 = arith.constant 0 : index
    %c0_28 = arith.constant 0 : index
    %57 = vector.load %arg5[%c6, %c0_27, %c0_28] : memref<9x1x256xf32, #tpu.memory_space<vmem>>, vector<1x1x256xf32>
    %58 = vector.shape_cast %57 : vector<1x1x256xf32> to vector<1x256xf32>
    %59 = vector.broadcast %58 : vector<1x256xf32> to vector<8x256xf32>
    %60 = arith.mulf %56, %59 : vector<8x256xf32>
    %c0_29 = arith.constant 0 : index
    %c6_30 = arith.constant 6 : index
    %61 = vector.load %arg3[%c0_29, %c6_30] : memref<8x9xf32, #tpu.memory_space<vmem>>, vector<8x1xf32>
    %62 = vector.broadcast %61 : vector<8x1xf32> to vector<8x256xf32>
    %63 = arith.mulf %62, %60 : vector<8x256xf32>
    %64 = arith.addf %55, %63 : vector<8x256xf32>
    %c208_i32 = arith.constant 208 : i32
    %65 = tpu.dynamic_rotate %5 by %c208_i32 dim 1 : vector<8x256xf32>, i32 -> vector<8x256xf32>
    %c7 = arith.constant 7 : index
    %c0_31 = arith.constant 0 : index
    %c0_32 = arith.constant 0 : index
    %66 = vector.load %arg5[%c7, %c0_31, %c0_32] : memref<9x1x256xf32, #tpu.memory_space<vmem>>, vector<1x1x256xf32>
    %67 = vector.shape_cast %66 : vector<1x1x256xf32> to vector<1x256xf32>
    %68 = vector.broadcast %67 : vector<1x256xf32> to vector<8x256xf32>
    %69 = arith.mulf %65, %68 : vector<8x256xf32>
    %c0_33 = arith.constant 0 : index
    %c7_34 = arith.constant 7 : index
    %70 = vector.load %arg3[%c0_33, %c7_34] : memref<8x9xf32, #tpu.memory_space<vmem>>, vector<8x1xf32>
    %71 = vector.broadcast %70 : vector<8x1xf32> to vector<8x256xf32>
    %72 = arith.mulf %71, %69 : vector<8x256xf32>
    %73 = arith.addf %64, %72 : vector<8x256xf32>
    %c192_i32 = arith.constant 192 : i32
    %74 = tpu.dynamic_rotate %5 by %c192_i32 dim 1 : vector<8x256xf32>, i32 -> vector<8x256xf32>
    %c8 = arith.constant 8 : index
    %c0_35 = arith.constant 0 : index
    %c0_36 = arith.constant 0 : index
    %75 = vector.load %arg5[%c8, %c0_35, %c0_36] : memref<9x1x256xf32, #tpu.memory_space<vmem>>, vector<1x1x256xf32>
    %76 = vector.shape_cast %75 : vector<1x1x256xf32> to vector<1x256xf32>
    %77 = vector.broadcast %76 : vector<1x256xf32> to vector<8x256xf32>
    %78 = arith.mulf %74, %77 : vector<8x256xf32>
    %c0_37 = arith.constant 0 : index
    %c8_38 = arith.constant 8 : index
    %79 = vector.load %arg3[%c0_37, %c8_38] : memref<8x9xf32, #tpu.memory_space<vmem>>, vector<8x1xf32>
    %80 = vector.broadcast %79 : vector<8x1xf32> to vector<8x256xf32>
    %81 = arith.mulf %80, %78 : vector<8x256xf32>
    %82 = arith.addf %73, %81 : vector<8x256xf32>
    %c0_39 = arith.constant 0 : index
    %c0_40 = arith.constant 0 : index
    %83 = vector.load %arg4[%c0_39, %c0_40] : memref<8x1xf32, #tpu.memory_space<vmem>>, vector<8x1xf32>
    %84 = vector.broadcast %83 : vector<8x1xf32> to vector<8x256xf32>
    %85 = arith.addf %82, %84 : vector<8x256xf32>
    %cst_41 = arith.constant 0.000000e+00 : f32
    %86 = vector.broadcast %cst_41 : f32 to vector<8x256xf32>
    %87 = arith.maximumf %85, %86 : vector<8x256xf32>
    %c17_i32 = arith.constant 17 : i32
    %88 = tpu.dynamic_rotate %87 by %c17_i32 dim 1 : vector<8x256xf32>, i32 -> vector<8x256xf32>
    %c0_42 = arith.constant 0 : index
    %c0_43 = arith.constant 0 : index
    %c0_44 = arith.constant 0 : index
    %89 = vector.load %arg10[%c0_42, %c0_43, %c0_44] : memref<9x1x256xf32, #tpu.memory_space<vmem>>, vector<1x1x256xf32>
    %90 = vector.shape_cast %89 : vector<1x1x256xf32> to vector<1x256xf32>
    %91 = vector.broadcast %90 : vector<1x256xf32> to vector<8x256xf32>
    %92 = arith.mulf %88, %91 : vector<8x256xf32>
    %c16_i32_45 = arith.constant 16 : i32
    %93 = tpu.dynamic_rotate %87 by %c16_i32_45 dim 1 : vector<8x256xf32>, i32 -> vector<8x256xf32>
    %c1_46 = arith.constant 1 : index
    %c0_47 = arith.constant 0 : index
    %c0_48 = arith.constant 0 : index
    %94 = vector.load %arg10[%c1_46, %c0_47, %c0_48] : memref<9x1x256xf32, #tpu.memory_space<vmem>>, vector<1x1x256xf32>
    %95 = vector.shape_cast %94 : vector<1x1x256xf32> to vector<1x256xf32>
    %96 = vector.broadcast %95 : vector<1x256xf32> to vector<8x256xf32>
    %97 = arith.mulf %93, %96 : vector<8x256xf32>
    %c15_i32 = arith.constant 15 : i32
    %98 = tpu.dynamic_rotate %87 by %c15_i32 dim 1 : vector<8x256xf32>, i32 -> vector<8x256xf32>
    %c2_49 = arith.constant 2 : index
    %c0_50 = arith.constant 0 : index
    %c0_51 = arith.constant 0 : index
    %99 = vector.load %arg10[%c2_49, %c0_50, %c0_51] : memref<9x1x256xf32, #tpu.memory_space<vmem>>, vector<1x1x256xf32>
    %100 = vector.shape_cast %99 : vector<1x1x256xf32> to vector<1x256xf32>
    %101 = vector.broadcast %100 : vector<1x256xf32> to vector<8x256xf32>
    %102 = arith.mulf %98, %101 : vector<8x256xf32>
    %c1_i32 = arith.constant 1 : i32
    %103 = tpu.dynamic_rotate %87 by %c1_i32 dim 1 : vector<8x256xf32>, i32 -> vector<8x256xf32>
    %c3_52 = arith.constant 3 : index
    %c0_53 = arith.constant 0 : index
    %c0_54 = arith.constant 0 : index
    %104 = vector.load %arg10[%c3_52, %c0_53, %c0_54] : memref<9x1x256xf32, #tpu.memory_space<vmem>>, vector<1x1x256xf32>
    %105 = vector.shape_cast %104 : vector<1x1x256xf32> to vector<1x256xf32>
    %106 = vector.broadcast %105 : vector<1x256xf32> to vector<8x256xf32>
    %107 = arith.mulf %103, %106 : vector<8x256xf32>
    %c255_i32 = arith.constant 255 : i32
    %108 = tpu.dynamic_rotate %87 by %c255_i32 dim 1 : vector<8x256xf32>, i32 -> vector<8x256xf32>
    %c5_55 = arith.constant 5 : index
    %c0_56 = arith.constant 0 : index
    %c0_57 = arith.constant 0 : index
    %109 = vector.load %arg10[%c5_55, %c0_56, %c0_57] : memref<9x1x256xf32, #tpu.memory_space<vmem>>, vector<1x1x256xf32>
    %110 = vector.shape_cast %109 : vector<1x1x256xf32> to vector<1x256xf32>
    %111 = vector.broadcast %110 : vector<1x256xf32> to vector<8x256xf32>
    %112 = arith.mulf %108, %111 : vector<8x256xf32>
    %c241_i32 = arith.constant 241 : i32
    %113 = tpu.dynamic_rotate %87 by %c241_i32 dim 1 : vector<8x256xf32>, i32 -> vector<8x256xf32>
    %c6_58 = arith.constant 6 : index
    %c0_59 = arith.constant 0 : index
    %c0_60 = arith.constant 0 : index
    %114 = vector.load %arg10[%c6_58, %c0_59, %c0_60] : memref<9x1x256xf32, #tpu.memory_space<vmem>>, vector<1x1x256xf32>
    %115 = vector.shape_cast %114 : vector<1x1x256xf32> to vector<1x256xf32>
    %116 = vector.broadcast %115 : vector<1x256xf32> to vector<8x256xf32>
    %117 = arith.mulf %113, %116 : vector<8x256xf32>
    %c240_i32_61 = arith.constant 240 : i32
    %118 = tpu.dynamic_rotate %87 by %c240_i32_61 dim 1 : vector<8x256xf32>, i32 -> vector<8x256xf32>
    %c7_62 = arith.constant 7 : index
    %c0_63 = arith.constant 0 : index
    %c0_64 = arith.constant 0 : index
    %119 = vector.load %arg10[%c7_62, %c0_63, %c0_64] : memref<9x1x256xf32, #tpu.memory_space<vmem>>, vector<1x1x256xf32>
    %120 = vector.shape_cast %119 : vector<1x1x256xf32> to vector<1x256xf32>
    %121 = vector.broadcast %120 : vector<1x256xf32> to vector<8x256xf32>
    %122 = arith.mulf %118, %121 : vector<8x256xf32>
    %c239_i32 = arith.constant 239 : i32
    %123 = tpu.dynamic_rotate %87 by %c239_i32 dim 1 : vector<8x256xf32>, i32 -> vector<8x256xf32>
    %c8_65 = arith.constant 8 : index
    %c0_66 = arith.constant 0 : index
    %c0_67 = arith.constant 0 : index
    %124 = vector.load %arg10[%c8_65, %c0_66, %c0_67] : memref<9x1x256xf32, #tpu.memory_space<vmem>>, vector<1x1x256xf32>
    %125 = vector.shape_cast %124 : vector<1x1x256xf32> to vector<1x256xf32>
    %126 = vector.broadcast %125 : vector<1x256xf32> to vector<8x256xf32>
    %127 = arith.mulf %123, %126 : vector<8x256xf32>
    %128 = tpu.concatenate %92, %97, %102, %107, %87, %112, %117, %122, %127 in 0 : vector<8x256xf32>, vector<8x256xf32>, vector<8x256xf32>, vector<8x256xf32>, vector<8x256xf32>, vector<8x256xf32>, vector<8x256xf32>, vector<8x256xf32>, vector<8x256xf32> -> vector<72x256xf32>
    %c0_68 = arith.constant 0 : index
    %c0_69 = arith.constant 0 : index
    %129 = vector.load %arg6[%c0_68, %c0_69] : memref<8x72xf32, #tpu.memory_space<vmem>>, vector<8x72xf32>
    %cst_70 = arith.constant dense<0.000000e+00> : vector<8x256xf32>
    %130 = tpu.matmul %129, %128, %cst_70 {dimension_numbers = #tpu.dot_dimension_numbers<[1], [0], [0], [1], [0, 0, 1, 1], [], []>} : vector<8x72xf32>, vector<72x256xf32>, vector<8x256xf32> -> vector<8x256xf32>
    %c0_71 = arith.constant 0 : index
    %c0_72 = arith.constant 0 : index
    %131 = vector.load %arg7[%c0_71, %c0_72] : memref<8x1xf32, #tpu.memory_space<vmem>>, vector<8x1xf32>
    %132 = vector.broadcast %131 : vector<8x1xf32> to vector<8x256xf32>
    %133 = arith.addf %130, %132 : vector<8x256xf32>
    %cst_73 = arith.constant 0.000000e+00 : f32
    %134 = vector.broadcast %cst_73 : f32 to vector<8x256xf32>
    %135 = arith.maximumf %133, %134 : vector<8x256xf32>
    %c17_i32_74 = arith.constant 17 : i32
    %136 = tpu.dynamic_rotate %135 by %c17_i32_74 dim 1 : vector<8x256xf32>, i32 -> vector<8x256xf32>
    %c0_75 = arith.constant 0 : index
    %c0_76 = arith.constant 0 : index
    %c0_77 = arith.constant 0 : index
    %137 = vector.load %arg10[%c0_75, %c0_76, %c0_77] : memref<9x1x256xf32, #tpu.memory_space<vmem>>, vector<1x1x256xf32>
    %138 = vector.shape_cast %137 : vector<1x1x256xf32> to vector<1x256xf32>
    %139 = vector.broadcast %138 : vector<1x256xf32> to vector<8x256xf32>
    %140 = arith.mulf %136, %139 : vector<8x256xf32>
    %c16_i32_78 = arith.constant 16 : i32
    %141 = tpu.dynamic_rotate %135 by %c16_i32_78 dim 1 : vector<8x256xf32>, i32 -> vector<8x256xf32>
    %c1_79 = arith.constant 1 : index
    %c0_80 = arith.constant 0 : index
    %c0_81 = arith.constant 0 : index
    %142 = vector.load %arg10[%c1_79, %c0_80, %c0_81] : memref<9x1x256xf32, #tpu.memory_space<vmem>>, vector<1x1x256xf32>
    %143 = vector.shape_cast %142 : vector<1x1x256xf32> to vector<1x256xf32>
    %144 = vector.broadcast %143 : vector<1x256xf32> to vector<8x256xf32>
    %145 = arith.mulf %141, %144 : vector<8x256xf32>
    %c15_i32_82 = arith.constant 15 : i32
    %146 = tpu.dynamic_rotate %135 by %c15_i32_82 dim 1 : vector<8x256xf32>, i32 -> vector<8x256xf32>
    %c2_83 = arith.constant 2 : index
    %c0_84 = arith.constant 0 : index
    %c0_85 = arith.constant 0 : index
    %147 = vector.load %arg10[%c2_83, %c0_84, %c0_85] : memref<9x1x256xf32, #tpu.memory_space<vmem>>, vector<1x1x256xf32>
    %148 = vector.shape_cast %147 : vector<1x1x256xf32> to vector<1x256xf32>
    %149 = vector.broadcast %148 : vector<1x256xf32> to vector<8x256xf32>
    %150 = arith.mulf %146, %149 : vector<8x256xf32>
    %c1_i32_86 = arith.constant 1 : i32
    %151 = tpu.dynamic_rotate %135 by %c1_i32_86 dim 1 : vector<8x256xf32>, i32 -> vector<8x256xf32>
    %c3_87 = arith.constant 3 : index
    %c0_88 = arith.constant 0 : index
    %c0_89 = arith.constant 0 : index
    %152 = vector.load %arg10[%c3_87, %c0_88, %c0_89] : memref<9x1x256xf32, #tpu.memory_space<vmem>>, vector<1x1x256xf32>
    %153 = vector.shape_cast %152 : vector<1x1x256xf32> to vector<1x256xf32>
    %154 = vector.broadcast %153 : vector<1x256xf32> to vector<8x256xf32>
    %155 = arith.mulf %151, %154 : vector<8x256xf32>
    %c255_i32_90 = arith.constant 255 : i32
    %156 = tpu.dynamic_rotate %135 by %c255_i32_90 dim 1 : vector<8x256xf32>, i32 -> vector<8x256xf32>
    %c5_91 = arith.constant 5 : index
    %c0_92 = arith.constant 0 : index
    %c0_93 = arith.constant 0 : index
    %157 = vector.load %arg10[%c5_91, %c0_92, %c0_93] : memref<9x1x256xf32, #tpu.memory_space<vmem>>, vector<1x1x256xf32>
    %158 = vector.shape_cast %157 : vector<1x1x256xf32> to vector<1x256xf32>
    %159 = vector.broadcast %158 : vector<1x256xf32> to vector<8x256xf32>
    %160 = arith.mulf %156, %159 : vector<8x256xf32>
    %c241_i32_94 = arith.constant 241 : i32
    %161 = tpu.dynamic_rotate %135 by %c241_i32_94 dim 1 : vector<8x256xf32>, i32 -> vector<8x256xf32>
    %c6_95 = arith.constant 6 : index
    %c0_96 = arith.constant 0 : index
    %c0_97 = arith.constant 0 : index
    %162 = vector.load %arg10[%c6_95, %c0_96, %c0_97] : memref<9x1x256xf32, #tpu.memory_space<vmem>>, vector<1x1x256xf32>
    %163 = vector.shape_cast %162 : vector<1x1x256xf32> to vector<1x256xf32>
    %164 = vector.broadcast %163 : vector<1x256xf32> to vector<8x256xf32>
    %165 = arith.mulf %161, %164 : vector<8x256xf32>
    %c240_i32_98 = arith.constant 240 : i32
    %166 = tpu.dynamic_rotate %135 by %c240_i32_98 dim 1 : vector<8x256xf32>, i32 -> vector<8x256xf32>
    %c7_99 = arith.constant 7 : index
    %c0_100 = arith.constant 0 : index
    %c0_101 = arith.constant 0 : index
    %167 = vector.load %arg10[%c7_99, %c0_100, %c0_101] : memref<9x1x256xf32, #tpu.memory_space<vmem>>, vector<1x1x256xf32>
    %168 = vector.shape_cast %167 : vector<1x1x256xf32> to vector<1x256xf32>
    %169 = vector.broadcast %168 : vector<1x256xf32> to vector<8x256xf32>
    %170 = arith.mulf %166, %169 : vector<8x256xf32>
    %c239_i32_102 = arith.constant 239 : i32
    %171 = tpu.dynamic_rotate %135 by %c239_i32_102 dim 1 : vector<8x256xf32>, i32 -> vector<8x256xf32>
    %c8_103 = arith.constant 8 : index
    %c0_104 = arith.constant 0 : index
    %c0_105 = arith.constant 0 : index
    %172 = vector.load %arg10[%c8_103, %c0_104, %c0_105] : memref<9x1x256xf32, #tpu.memory_space<vmem>>, vector<1x1x256xf32>
    %173 = vector.shape_cast %172 : vector<1x1x256xf32> to vector<1x256xf32>
    %174 = vector.broadcast %173 : vector<1x256xf32> to vector<8x256xf32>
    %175 = arith.mulf %171, %174 : vector<8x256xf32>
    %176 = tpu.concatenate %140, %145, %150, %155, %135, %160, %165, %170, %175 in 0 : vector<8x256xf32>, vector<8x256xf32>, vector<8x256xf32>, vector<8x256xf32>, vector<8x256xf32>, vector<8x256xf32>, vector<8x256xf32>, vector<8x256xf32>, vector<8x256xf32> -> vector<72x256xf32>
    %c0_106 = arith.constant 0 : index
    %c0_107 = arith.constant 0 : index
    %177 = vector.load %arg8[%c0_106, %c0_107] : memref<8x72xf32, #tpu.memory_space<vmem>>, vector<8x72xf32>
    %cst_108 = arith.constant dense<0.000000e+00> : vector<8x256xf32>
    %178 = tpu.matmul %177, %176, %cst_108 {dimension_numbers = #tpu.dot_dimension_numbers<[1], [0], [0], [1], [0, 0, 1, 1], [], []>} : vector<8x72xf32>, vector<72x256xf32>, vector<8x256xf32> -> vector<8x256xf32>
    %c0_109 = arith.constant 0 : index
    %c0_110 = arith.constant 0 : index
    %179 = vector.load %arg9[%c0_109, %c0_110] : memref<8x1xf32, #tpu.memory_space<vmem>>, vector<8x1xf32>
    %180 = vector.broadcast %179 : vector<8x1xf32> to vector<8x256xf32>
    %181 = arith.addf %178, %180 : vector<8x256xf32>
    %cst_111 = arith.constant 0.000000e+00 : f32
    %182 = vector.broadcast %cst_111 : f32 to vector<8x256xf32>
    %183 = arith.maximumf %181, %182 : vector<8x256xf32>
    %184 = arith.truncf %183 : vector<8x256xf32> to vector<8x256xbf16>
    %c0_112 = arith.constant 0 : index
    %c0_113 = arith.constant 0 : index
    %185 = vector.load %arg2[%c0_112, %c0_113] : memref<256x256xbf16, #tpu.memory_space<vmem>>, vector<256x256xbf16>
    %cst_114 = arith.constant dense<0.000000e+00> : vector<8x256xf32>
    %186 = tpu.matmul %184, %185, %cst_114 {dimension_numbers = #tpu.dot_dimension_numbers<[1], [0], [0], [1], [0, 0, 1, 1], [], []>} : vector<8x256xbf16>, vector<256x256xbf16>, vector<8x256xf32> -> vector<8x256xf32>
    %c0_115 = arith.constant 0 : index
    %c0_116 = arith.constant 0 : index
    %187 = vector.load %arg11[%c0_115, %c0_116] : memref<8x256xf32, #tpu.memory_space<vmem>>, vector<8x256xf32>
    tpu.vector_store %arg11[%c0_115, %c0_116], %186 {strides = array<i32>} : memref<8x256xf32, #tpu.memory_space<vmem>>, vector<8x256xf32>,
    return
  }
}

</mosaic_0001>

<llo_original>
// kernel: forward.1
$region0: #{forward.1}
  #allocation0 [shape = 'u32[]', space=smem, size = 0x4, offset = 0x4, fixed_abs, tag = 'smem constant byte address 0x4 - core index']
  #allocation1 [shape = 'u32[144,128]{1,0:T(1,128)}', space=vmem, size = 0x12000, scoped, tag = 'internal scratch']
  %s0 = inlined_call_operand.vmem [shape: f32[8,256], index: 0, kind: input, shape index: {}]
  %s1 = inlined_call_operand.hbm [shape: bf16[256,256], index: 1, kind: input, shape index: {}]
  %s2 = inlined_call_operand.hbm [shape: bf16[256,256], index: 2, kind: input, shape index: {}]
  %s3 = inlined_call_operand.vmem [shape: f32[8,9], index: 3, kind: input, shape index: {}]
  %s4 = inlined_call_operand.vmem [shape: f32[8,1], index: 4, kind: input, shape index: {}]
  %s5 = inlined_call_operand.vmem [shape: f32[9,1,256], index: 5, kind: input, shape index: {}]
  %s6 = inlined_call_operand.vmem [shape: f32[8,72], index: 6, kind: input, shape index: {}]
  %s7 = inlined_call_operand.vmem [shape: f32[8,1], index: 7, kind: input, shape index: {}]
  %s8 = inlined_call_operand.vmem [shape: f32[8,72], index: 8, kind: input, shape index: {}]
  %s9 = inlined_call_operand.vmem [shape: f32[8,1], index: 9, kind: input, shape index: {}]
  %s10 = inlined_call_operand.vmem [shape: f32[9,1,256], index: 10, kind: input, shape index: {}]
  %s11 = inlined_call_operand.vmem [shape: f32[8,256], index: 11, kind: output, shape index: {}]
  %s12 = sld [smem:[#allocation0]]
  $region62: #{forward.1} parent=0
    _
  %s14 = ssub.s32 1, %s12
  %s15 = scalar_select 0, %s14, %s12
  $region1: #{forward.1} parent=0
    #allocation2 [shape = 'u8[131072]{0}', space=vmem, size = 0x20000, scoped, tag = 'input window, operand 1, single buffered']
    #allocation3 [shape = 's32[1]{0}', space=sflag, size = 0x4, scoped, tag = 'scoped memory for forward.1']
    #allocation4 [shape = 'u8[131072]{0}', space=vmem, size = 0x20000, scoped, tag = 'input window, operand 2, single buffered']
    #allocation5 [shape = 's32[1]{0}', space=sflag, size = 0x4, scoped, tag = 'scoped memory for forward.1']
    %16 = vsyncpa [#allocation3], 0
    %17 = vsyncpa [#allocation5], 0
    // Predicated region
    $region2: #{forward.1} parent=1 // pred_check
      _
    $region3: #{forward.1} parent=1 // pred_check_branch
      %19 = sbr.rel (0) target = $region5
    $region4: #{forward.1} parent=1 // pred_region
      _
    $region5: #{forward.1} parent=1 // pred_fallthru
      _
    // Predicated region
    $region6: #{forward.1} parent=1 // pred_check
      _
    $region7: #{forward.1} parent=1 // pred_check_branch
      %21 = sbr.rel (0) target = $region9
    $region8: #{forward.1} parent=1 // pred_region
      %s23 = ssub.s32 4096, 4096
      %24 = vsyncadd [#allocation3], %s23
      %s25 = sshll.u32 [#allocation2], 4
      %s26 = int_to_ptr.vmem [resolvable:$true] %s25
      %31 = dma.hbm_to_vmem [thread:$0]  %s1, 4096, %s26, [#allocation3], 128, 128, 8
    $region9: #{forward.1} parent=1 // pred_fallthru
      _
    // Predicated region
    $region10: #{forward.1} parent=1 // pred_check
      _
    $region11: #{forward.1} parent=1 // pred_check_branch
      %33 = sbr.rel (0) target = $region13
    $region12: #{forward.1} parent=1 // pred_region
      %s35 = ssub.s32 4096, 4096
      %36 = vsyncadd [#allocation5], %s35
      %s37 = sshll.u32 [#allocation4], 4
      %s38 = int_to_ptr.vmem [resolvable:$true] %s37
      %43 = dma.hbm_to_vmem [thread:$0]  %s2, 4096, %s38, [#allocation5], 128, 128, 8
    $region13: #{forward.1} parent=1 // pred_fallthru
      _
    // Predicated region
    $region14: #{forward.1} parent=1 // pred_check
      _
    $region15: #{forward.1} parent=1 // pred_check_branch
      %45 = sbr.rel (0) target = $region17
    $region16: #{forward.1} parent=1 // pred_region
      _
    $region17: #{forward.1} parent=1 // pred_fallthru
      _
    // Predicated region
    $region18: #{forward.1} parent=1 // pred_check
      _
    $region19: #{forward.1} parent=1 // pred_check_branch
      %47 = sbr.rel (0) target = $region21
    $region20: #{forward.1} parent=1 // pred_region
      _
    $region21: #{forward.1} parent=1 // pred_fallthru
      _
    // Predicated region
    $region22: #{forward.1} parent=1 // pred_check
      _
    $region23: #{forward.1} parent=1 // pred_check_branch
      %49 = sbr.rel (0) target = $region25
    $region24: #{forward.1} parent=1 // pred_region
      _
    $region25: #{forward.1} parent=1 // pred_fallthru
      _
    // Predicated region
    $region26: #{forward.1} parent=1 // pred_check
      _
    $region27: #{forward.1} parent=1 // pred_check_branch
      %51 = sbr.rel (0) target = $region29
    $region28: #{forward.1} parent=1 // pred_region
      _
    $region29: #{forward.1} parent=1 // pred_fallthru
      _
    // Predicated region
    $region30: #{forward.1} parent=1 // pred_check
      _
    $region31: #{forward.1} parent=1 // pred_check_branch
      %53 = sbr.rel (0) target = $region33
    $region32: #{forward.1} parent=1 // pred_region
      _
    $region33: #{forward.1} parent=1 // pred_fallthru
      _
    // Predicated region
    $region34: #{forward.1} parent=1 // pred_check
      _
    $region35: #{forward.1} parent=1 // pred_check_branch
      %55 = sbr.rel (0) target = $region37
    $region36: #{forward.1} parent=1 // pred_region
      _
    $region37: #{forward.1} parent=1 // pred_fallthru
      _
    // Predicated region
    $region38: #{forward.1} parent=1 // pred_check
      _
    $region39: #{forward.1} parent=1 // pred_check_branch
      %57 = sbr.rel (0) target = $region41
    $region40: #{forward.1} parent=1 // pred_region
      _
    $region41: #{forward.1} parent=1 // pred_fallthru
      _
    // Predicated region
    $region42: #{forward.1} parent=1 // pred_check
      _
    $region43: #{forward.1} parent=1 // pred_check_branch
      %59 = sbr.rel (0) target = $region45
    $region44: #{forward.1} parent=1 // pred_region
      _
    $region45: #{forward.1} parent=1 // pred_fallthru
      _
    // Predicated region
    $region46: #{forward.1} parent=1 // pred_check
      _
    $region47: #{forward.1} parent=1 // pred_check_branch
      %61 = sbr.rel (0) target = $region49
    $region48: #{forward.1} parent=1 // pred_region
      %62 = dma.done [#allocation3], 4096
    $region49: #{forward.1} parent=1 // pred_fallthru
      _
    // Predicated region
    $region50: #{forward.1} parent=1 // pred_check
      _
    $region51: #{forward.1} parent=1 // pred_check_branch
      %64 = sbr.rel (0) target = $region53
    $region52: #{forward.1} parent=1 // pred_region
      %65 = dma.done [#allocation5], 4096
    $region53: #{forward.1} parent=1 // pred_fallthru
      _
    %v66 = vld [vmem:[%s0] sm:$0xff]
    %v67 = vld [vmem:[%s0 + $0x8] sm:$0xff]
    %v68 = vmax.f32 %v66, 0.0
    %v69 = vmax.f32 %v67, 0.0
    %v70 = vpack.c.bf16 %v68, %v68
    %v71 = vpack.c.bf16 %v69, %v69
    %v72 = vld [vmem:[#allocation2] sm:$0xff]
    %v73 = vld [vmem:[#allocation2 + $0x8] sm:$0xff]
    %v74 = vld [vmem:[#allocation2 + $0x10] sm:$0xff]
    %v75 = vld [vmem:[#allocation2 + $0x18] sm:$0xff]
    %v76 = vld [vmem:[#allocation2 + $0x20] sm:$0xff]
    %v77 = vld [vmem:[#allocation2 + $0x28] sm:$0xff]
    %v78 = vld [vmem:[#allocation2 + $0x30] sm:$0xff]
    %v79 = vld [vmem:[#allocation2 + $0x38] sm:$0xff]
    %v80 = vld [vmem:[#allocation2 + $0x40] sm:$0xff]
    %v81 = vld [vmem:[#allocation2 + $0x48] sm:$0xff]
    %v82 = vld [vmem:[#allocation2 + $0x50] sm:$0xff]
    %v83 = vld [vmem:[#allocation2 + $0x58] sm:$0xff]
    %v84 = vld [vmem:[#allocation2 + $0x60] sm:$0xff]
    %v85 = vld [vmem:[#allocation2 + $0x68] sm:$0xff]
    %v86 = vld [vmem:[#allocation2 + $0x70] sm:$0xff]
    %v87 = vld [vmem:[#allocation2 + $0x78] sm:$0xff]
    %v88 = vld [vmem:[#allocation2 + $0x80] sm:$0xff]
    %v89 = vld [vmem:[#allocation2 + $0x88] sm:$0xff]
    %v90 = vld [vmem:[#allocation2 + $0x90] sm:$0xff]
    %v91 = vld [vmem:[#allocation2 + $0x98] sm:$0xff]
    %v92 = vld [vmem:[#allocation2 + $0xa0] sm:$0xff]
    %v93 = vld [vmem:[#allocation2 + $0xa8] sm:$0xff]
    %v94 = vld [vmem:[#allocation2 + $0xb0] sm:$0xff]
    %v95 = vld [vmem:[#allocation2 + $0xb8] sm:$0xff]
    %v96 = vld [vmem:[#allocation2 + $0xc0] sm:$0xff]
    %v97 = vld [vmem:[#allocation2 + $0xc8] sm:$0xff]
    %v98 = vld [vmem:[#allocation2 + $0xd0] sm:$0xff]
    %v99 = vld [vmem:[#allocation2 + $0xd8] sm:$0xff]
    %v100 = vld [vmem:[#allocation2 + $0xe0] sm:$0xff]
    %v101 = vld [vmem:[#allocation2 + $0xe8] sm:$0xff]
    %v102 = vld [vmem:[#allocation2 + $0xf0] sm:$0xff]
    %v103 = vld [vmem:[#allocation2 + $0xf8] sm:$0xff]
    %v136 = vunpack.c.l.b16 %v72
    %v137 = vunpack.c.h.b16 %v72
    %v138 = vunpack.c.l.b16 %v73
    %v139 = vunpack.c.h.b16 %v73
    %v140 = vunpack.c.l.b16 %v74
    %v141 = vunpack.c.h.b16 %v74
    %v142 = vunpack.c.l.b16 %v75
    %v143 = vunpack.c.h.b16 %v75
    %v144 = vunpack.c.l.b16 %v76
    %v145 = vunpack.c.h.b16 %v76
    %v146 = vunpack.c.l.b16 %v77
    %v147 = vunpack.c.h.b16 %v77
    %v148 = vunpack.c.l.b16 %v78
    %v149 = vunpack.c.h.b16 %v78
    %v150 = vunpack.c.l.b16 %v79
    %v151 = vunpack.c.h.b16 %v79
    %v152 = vunpack.c.l.b16 %v80
    %v153 = vunpack.c.h.b16 %v80
    %v154 = vunpack.c.l.b16 %v81
    %v155 = vunpack.c.h.b16 %v81
    %v156 = vunpack.c.l.b16 %v82
    %v157 = vunpack.c.h.b16 %v82
    %v158 = vunpack.c.l.b16 %v83
    %v159 = vunpack.c.h.b16 %v83
    %v160 = vunpack.c.l.b16 %v84
    %v161 = vunpack.c.h.b16 %v84
    %v162 = vunpack.c.l.b16 %v85
    %v163 = vunpack.c.h.b16 %v85
    %v164 = vunpack.c.l.b16 %v86
    %v165 = vunpack.c.h.b16 %v86
    %v166 = vunpack.c.l.b16 %v87
    %v167 = vunpack.c.h.b16 %v87
    %v168 = vunpack.c.l.b16 %v88
    %v169 = vunpack.c.h.b16 %v88
    %v170 = vunpack.c.l.b16 %v89
    %v171 = vunpack.c.h.b16 %v89
    %v172 = vunpack.c.l.b16 %v90
    %v173 = vunpack.c.h.b16 %v90
    %v174 = vunpack.c.l.b16 %v91
    %v175 = vunpack.c.h.b16 %v91
    %v176 = vunpack.c.l.b16 %v92
    %v177 = vunpack.c.h.b16 %v92
    %v178 = vunpack.c.l.b16 %v93
    %v179 = vunpack.c.h.b16 %v93
    %v180 = vunpack.c.l.b16 %v94
    %v181 = vunpack.c.h.b16 %v94
    %v182 = vunpack.c.l.b16 %v95
    %v183 = vunpack.c.h.b16 %v95
    %v184 = vunpack.c.l.b16 %v96
    %v185 = vunpack.c.h.b16 %v96
    %v186 = vunpack.c.l.b16 %v97
    %v187 = vunpack.c.h.b16 %v97
    %v188 = vunpack.c.l.b16 %v98
    %v189 = vunpack.c.h.b16 %v98
    %v190 = vunpack.c.l.b16 %v99
    %v191 = vunpack.c.h.b16 %v99
    %v192 = vunpack.c.l.b16 %v100
    %v193 = vunpack.c.h.b16 %v100
    %v194 = vunpack.c.l.b16 %v101
    %v195 = vunpack.c.h.b16 %v101
    %v196 = vunpack.c.l.b16 %v102
    %v197 = vunpack.c.h.b16 %v102
    %v198 = vunpack.c.l.b16 %v103
    %v199 = vunpack.c.h.b16 %v103
    %v200 = vpack.c.b16 %v138, %v136
    %v201 = vpack.c.b16 %v139, %v137
    %v202 = vpack.c.b16 %v142, %v140
    %v203 = vpack.c.b16 %v143, %v141
    %v204 = vpack.c.b16 %v146, %v144
    %v205 = vpack.c.b16 %v147, %v145
    %v206 = vpack.c.b16 %v150, %v148
    %v207 = vpack.c.b16 %v151, %v149
    %v208 = vpack.c.b16 %v154, %v152
    %v209 = vpack.c.b16 %v155, %v153
    %v210 = vpack.c.b16 %v158, %v156
    %v211 = vpack.c.b16 %v159, %v157
    %v212 = vpack.c.b16 %v162, %v160
    %v213 = vpack.c.b16 %v163, %v161
    %v214 = vpack.c.b16 %v166, %v164
    %v215 = vpack.c.b16 %v167, %v165
    %v216 = vpack.c.b16 %v170, %v168
    %v217 = vpack.c.b16 %v171, %v169
    %v218 = vpack.c.b16 %v174, %v172
    %v219 = vpack.c.b16 %v175, %v173
    %v220 = vpack.c.b16 %v178, %v176
    %v221 = vpack.c.b16 %v179, %v177
    %v222 = vpack.c.b16 %v182, %v180
    %v223 = vpack.c.b16 %v183, %v181
    %v224 = vpack.c.b16 %v186, %v184
    %v225 = vpack.c.b16 %v187, %v185
    %v226 = vpack.c.b16 %v190, %v188
    %v227 = vpack.c.b16 %v191, %v189
    %v228 = vpack.c.b16 %v194, %v192
    %v229 = vpack.c.b16 %v195, %v193
    %v230 = vpack.c.b16 %v198, %v196
    %v231 = vpack.c.b16 %v199, %v197
    %264 = vmatprep.subr.bf16.mxu0 %v215
    %265 = vmatpush1.bf16.msra.mxu0 %v214
    %266 = vmatprep.subr.bf16.mxu0 %v213
    %267 = vmatpush1.bf16.msra.mxu0 %v212
    %268 = vmatprep.subr.bf16.mxu0 %v211
    %269 = vmatpush1.bf16.msra.mxu0 %v210
    %270 = vmatprep.subr.bf16.mxu0 %v209
    %271 = vmatpush1.bf16.msra.mxu0 %v208
    %272 = vmatprep.subr.bf16.mxu0 %v207
    %273 = vmatpush1.bf16.msra.mxu0 %v206
    %274 = vmatprep.subr.bf16.mxu0 %v205
    %275 = vmatpush1.bf16.msra.mxu0 %v204
    %276 = vmatprep.subr.bf16.mxu0 %v203
    %277 = vmatpush1.bf16.msra.mxu0 %v202
    %278 = vmatprep.subr.bf16.mxu0 %v201
    %279 = vmatpush1.bf16.msra.mxu0 %v200
    %280 = vmatprep.subr.bf16.mxu0 %v231
    %281 = vmatpush2.bf16.msra.mxu0 %v230
    %282 = vmatprep.subr.bf16.mxu0 %v229
    %283 = vmatpush2.bf16.msra.mxu0 %v228
    %284 = vmatprep.subr.bf16.mxu0 %v227
    %285 = vmatpush2.bf16.msra.mxu0 %v226
    %286 = vmatprep.subr.bf16.mxu0 %v225
    %287 = vmatpush2.bf16.msra.mxu0 %v224
    %288 = vmatprep.subr.bf16.mxu0 %v223
    %289 = vmatpush2.bf16.msra.mxu0 %v222
    %290 = vmatprep.subr.bf16.mxu0 %v221
    %291 = vmatpush2.bf16.msra.mxu0 %v220
    %292 = vmatprep.subr.bf16.mxu0 %v219
    %293 = vmatpush2.bf16.msra.mxu0 %v218
    %294 = vmatprep.subr.bf16.mxu0 %v217
    %295 = vmatpush2.bf16.msra.mxu0 %v216
    %296 = vmatprep.mubr.bf16.mxu0 %v71
    %297 = vmatmul.mubr.bf16.gmra.mxu0 %v70
    %v298 = vpop.f32.mrf.mxu0
    %v299 = vadd.f32 0.0, %v298
    %v300 = vpop.f32.mrf.mxu0
    %v301 = vadd.f32 0.0, %v300
    %v302 = vpop.f32.mrf.mxu0
    %v303 = vpop.f32.mrf.mxu0
    %304 = vdwg.mxu0
    %305 = vrot.lane.b32.xlu0 %v299, 64
    %v306 = vpop.permute.xlu0 %305
    %307 = vrot.lane.b32.xlu0 %v301, 64
    %v308 = vpop.permute.xlu0 %307
    %v309 = vlaneseq
    %v310 = vand.u32 %v309, 127
    %vm311 = vcmp.lt.s32.totalorder %v310, 64
    %v312 = vsel %vm311, %v306, %v308
    %v313 = vsel %vm311, %v308, %v306
    %v314 = vld [vmem:[%s5] sm:$0x3]
    %v316 = vlaneseq
    %v317 = vshrl.u32 %v316, 7
    %v318 = vsub.s32 0, %v317
    %v319 = vrot.slane %v314, %v318
    %v320 = vlaneseq
    %v321 = vshrl.u32 %v320, 7
    %v322 = vsub.s32 1, %v321
    %v323 = vrot.slane %v314, %v322
    %v326 = vmul.f32 %v313, %v319
    %v327 = vmul.f32 %v312, %v323
    %v328 = vld [vmem:[%s3] sm:$0xff]
    %330 = vset.pattern.permute.xlu0 0
    %331 = vperm.xlu0 %330, %v328
    %v332 = vpop.permute.xlu0 %331
    %v334 = vmul.f32 %v332, %v326
    %v335 = vmul.f32 %v332, %v327
    %v336 = vadd.f32 %v334, 0.0
    %v337 = vadd.f32 %v335, 0.0
    %338 = vrot.lane.b32.xlu0 %v299, 48
    %v339 = vpop.permute.xlu0 %338
    %340 = vrot.lane.b32.xlu0 %v301, 48
    %v341 = vpop.permute.xlu0 %340
    %vm342 = vcmp.lt.s32.totalorder %v310, 48
    %v343 = vsel %vm342, %v339, %v341
    %v344 = vsel %vm342, %v341, %v339
    %s345 = scalar_lea.vmem %s5, 2
    %v346 = vld [vmem:[%s345] sm:$0x3]
    %v348 = vlaneseq
    %v349 = vshrl.u32 %v348, 7
    %v350 = vsub.s32 0, %v349
    %v351 = vrot.slane %v346, %v350
    %v352 = vlaneseq
    %v353 = vshrl.u32 %v352, 7
    %v354 = vsub.s32 1, %v353
    %v355 = vrot.slane %v346, %v354
    %v358 = vmul.f32 %v344, %v351
    %v359 = vmul.f32 %v343, %v355
    %360 = vset.pattern.permute.xlu0 1
    %361 = vperm.xlu0 %360, %v328
    %v362 = vpop.permute.xlu0 %361
    %v364 = vmul.f32 %v362, %v358
    %v365 = vmul.f32 %v362, %v359
    %v366 = vadd.f32 %v336, %v364
    %v367 = vadd.f32 %v337, %v365
    %368 = vrot.lane.b32.xlu0 %v299, 32
    %v369 = vpop.permute.xlu0 %368
    %370 = vrot.lane.b32.xlu0 %v301, 32
    %v371 = vpop.permute.xlu0 %370
    %vm372 = vcmp.lt.s32.totalorder %v310, 32
    %v373 = vsel %vm372, %v369, %v371
    %v374 = vsel %vm372, %v371, %v369
    %s375 = scalar_lea.vmem %s5, 4
    %v376 = vld [vmem:[%s375] sm:$0x3]
    %v378 = vlaneseq
    %v379 = vshrl.u32 %v378, 7
    %v380 = vsub.s32 0, %v379
    %v381 = vrot.slane %v376, %v380
    %v382 = vlaneseq
    %v383 = vshrl.u32 %v382, 7
    %v384 = vsub.s32 1, %v383
    %v385 = vrot.slane %v376, %v384
    %v388 = vmul.f32 %v374, %v381
    %v389 = vmul.f32 %v373, %v385
    %390 = vset.pattern.permute.xlu0 2
    %391 = vperm.xlu0 %390, %v328
    %v392 = vpop.permute.xlu0 %391
    %v394 = vmul.f32 %v392, %v388
    %v395 = vmul.f32 %v392, %v389
    %v396 = vadd.f32 %v366, %v394
    %v397 = vadd.f32 %v367, %v395
    %398 = vrot.lane.b32.xlu0 %v299, 16
    %v399 = vpop.permute.xlu0 %398
    %400 = vrot.lane.b32.xlu0 %v301, 16
    %v401 = vpop.permute.xlu0 %400
    %vm402 = vcmp.lt.s32.totalorder %v310, 16
    %v403 = vsel %vm402, %v399, %v401
    %v404 = vsel %vm402, %v401, %v399
    %s405 = scalar_lea.vmem %s5, 6
    %v406 = vld [vmem:[%s405] sm:$0x3]
    %v408 = vlaneseq
    %v409 = vshrl.u32 %v408, 7
    %v410 = vsub.s32 0, %v409
    %v411 = vrot.slane %v406, %v410
    %v412 = vlaneseq
    %v413 = vshrl.u32 %v412, 7
    %v414 = vsub.s32 1, %v413
    %v415 = vrot.slane %v406, %v414
    %v418 = vmul.f32 %v404, %v411
    %v419 = vmul.f32 %v403, %v415
    %420 = vset.pattern.permute.xlu0 3
    %421 = vperm.xlu0 %420, %v328
    %v422 = vpop.permute.xlu0 %421
    %v424 = vmul.f32 %v422, %v418
    %v425 = vmul.f32 %v422, %v419
    %v426 = vadd.f32 %v396, %v424
    %v427 = vadd.f32 %v397, %v425
    %428 = vset.pattern.permute.xlu0 4
    %429 = vperm.xlu0 %428, %v328
    %v430 = vpop.permute.xlu0 %429
    %v432 = vmul.f32 %v430, %v299
    %v433 = vmul.f32 %v430, %v301
    %v434 = vadd.f32 %v426, %v432
    %v435 = vadd.f32 %v427, %v433
    %436 = vrot.lane.b32.xlu0 %v299, 112
    %v437 = vpop.permute.xlu0 %436
    %438 = vrot.lane.b32.xlu0 %v301, 112
    %v439 = vpop.permute.xlu0 %438
    %vm440 = vcmp.lt.s32.totalorder %v310, 112
    %v441 = vsel %vm440, %v437, %v439
    %v442 = vsel %vm440, %v439, %v437
    %s443 = scalar_lea.vmem %s5, 10
    %v444 = vld [vmem:[%s443] sm:$0x3]
    %v446 = vlaneseq
    %v447 = vshrl.u32 %v446, 7
    %v448 = vsub.s32 0, %v447
    %v449 = vrot.slane %v444, %v448
    %v450 = vlaneseq
    %v451 = vshrl.u32 %v450, 7
    %v452 = vsub.s32 1, %v451
    %v453 = vrot.slane %v444, %v452
    %v456 = vmul.f32 %v441, %v449
    %v457 = vmul.f32 %v442, %v453
    %458 = vset.pattern.permute.xlu0 5
    %459 = vperm.xlu0 %458, %v328
    %v460 = vpop.permute.xlu0 %459
    %v462 = vmul.f32 %v460, %v456
    %v463 = vmul.f32 %v460, %v457
    %v464 = vadd.f32 %v434, %v462
    %v465 = vadd.f32 %v435, %v463
    %466 = vrot.lane.b32.xlu0 %v299, 96
    %v467 = vpop.permute.xlu0 %466
    %468 = vrot.lane.b32.xlu0 %v301, 96
    %v469 = vpop.permute.xlu0 %468
    %vm470 = vcmp.lt.s32.totalorder %v310, 96
    %v471 = vsel %vm470, %v467, %v469
    %v472 = vsel %vm470, %v469, %v467
    %s473 = scalar_lea.vmem %s5, 12
    %v474 = vld [vmem:[%s473] sm:$0x3]
    %v476 = vlaneseq
    %v477 = vshrl.u32 %v476, 7
    %v478 = vsub.s32 0, %v477
    %v479 = vrot.slane %v474, %v478
    %v480 = vlaneseq
    %v481 = vshrl.u32 %v480, 7
    %v482 = vsub.s32 1, %v481
    %v483 = vrot.slane %v474, %v482
    %v486 = vmul.f32 %v471, %v479
    %v487 = vmul.f32 %v472, %v483
    %488 = vset.pattern.permute.xlu0 6
    %489 = vperm.xlu0 %488, %v328
    %v490 = vpop.permute.xlu0 %489
    %v492 = vmul.f32 %v490, %v486
    %v493 = vmul.f32 %v490, %v487
    %v494 = vadd.f32 %v464, %v492
    %v495 = vadd.f32 %v465, %v493
    %496 = vrot.lane.b32.xlu0 %v299, 80
    %v497 = vpop.permute.xlu0 %496
    %498 = vrot.lane.b32.xlu0 %v301, 80
    %v499 = vpop.permute.xlu0 %498
    %vm500 = vcmp.lt.s32.totalorder %v310, 80
    %v501 = vsel %vm500, %v497, %v499
    %v502 = vsel %vm500, %v499, %v497
    %s503 = scalar_lea.vmem %s5, 14
    %v504 = vld [vmem:[%s503] sm:$0x3]
    %v506 = vlaneseq
    %v507 = vshrl.u32 %v506, 7
    %v508 = vsub.s32 0, %v507
    %v509 = vrot.slane %v504, %v508
    %v510 = vlaneseq
    %v511 = vshrl.u32 %v510, 7
    %v512 = vsub.s32 1, %v511
    %v513 = vrot.slane %v504, %v512
    %v516 = vmul.f32 %v501, %v509
    %v517 = vmul.f32 %v502, %v513
    %518 = vset.pattern.permute.xlu0 7
    %519 = vperm.xlu0 %518, %v328
    %v520 = vpop.permute.xlu0 %519
    %v522 = vmul.f32 %v520, %v516
    %v523 = vmul.f32 %v520, %v517
    %v524 = vadd.f32 %v494, %v522
    %v525 = vadd.f32 %v495, %v523
    %s526 = scalar_lea.vmem %s5, 16
    %v527 = vld [vmem:[%s526] sm:$0x3]
    %v529 = vlaneseq
    %v530 = vshrl.u32 %v529, 7
    %v531 = vsub.s32 0, %v530
    %v532 = vrot.slane %v527, %v531
    %v533 = vlaneseq
    %v534 = vshrl.u32 %v533, 7
    %v535 = vsub.s32 1, %v534
    %v536 = vrot.slane %v527, %v535
    %v539 = vmul.f32 %v312, %v532
    %v540 = vmul.f32 %v313, %v536
    %541 = vset.pattern.permute.xlu0 8
    %542 = vperm.xlu0 %541, %v328
    %v543 = vpop.permute.xlu0 %542
    %v545 = vmul.f32 %v543, %v539
    %v546 = vmul.f32 %v543, %v540
    %v547 = vadd.f32 %v524, %v545
    %v548 = vadd.f32 %v525, %v546
    %v549 = vld [vmem:[%s4] sm:$0xff]
    %551 = vset.pattern.permute.xlu0 0
    %552 = vperm.xlu0 %551, %v549
    %v553 = vpop.permute.xlu0 %552
    %v555 = vadd.f32 %v547, %v553
    %v556 = vadd.f32 %v548, %v553
    %v557 = vmax.f32 %v555, 0.0
    %v558 = vmax.f32 %v556, 0.0
    %559 = vrot.lane.b32.xlu0 %v557, 17
    %v560 = vpop.permute.xlu0 %559
    %561 = vrot.lane.b32.xlu0 %v558, 17
    %v562 = vpop.permute.xlu0 %561
    %vm563 = vcmp.lt.s32.totalorder %v310, 17
    %v564 = vsel %vm563, %v560, %v562
    %v565 = vsel %vm563, %v562, %v560
    %v566 = vld [vmem:[%s10] sm:$0x3]
    %v568 = vlaneseq
    %v569 = vshrl.u32 %v568, 7
    %v570 = vsub.s32 0, %v569
    %v571 = vrot.slane %v566, %v570
    %v572 = vlaneseq
    %v573 = vshrl.u32 %v572, 7
    %v574 = vsub.s32 1, %v573
    %v575 = vrot.slane %v566, %v574
    %v578 = vmul.f32 %v565, %v571
    %v579 = vmul.f32 %v564, %v575
    %580 = vrot.lane.b32.xlu0 %v557, 16
    %v581 = vpop.permute.xlu0 %580
    %582 = vrot.lane.b32.xlu0 %v558, 16
    %v583 = vpop.permute.xlu0 %582
    %v584 = vsel %vm402, %v581, %v583
    %v585 = vsel %vm402, %v583, %v581
    %s586 = scalar_lea.vmem %s10, 2
    %v587 = vld [vmem:[%s586] sm:$0x3]
    %v589 = vlaneseq
    %v590 = vshrl.u32 %v589, 7
    %v591 = vsub.s32 0, %v590
    %v592 = vrot.slane %v587, %v591
    %v593 = vlaneseq
    %v594 = vshrl.u32 %v593, 7
    %v595 = vsub.s32 1, %v594
    %v596 = vrot.slane %v587, %v595
    %v599 = vmul.f32 %v585, %v592
    %v600 = vmul.f32 %v584, %v596
    %601 = vrot.lane.b32.xlu0 %v557, 15
    %v602 = vpop.permute.xlu0 %601
    %603 = vrot.lane.b32.xlu0 %v558, 15
    %v604 = vpop.permute.xlu0 %603
    %vm605 = vcmp.lt.s32.totalorder %v310, 15
    %v606 = vsel %vm605, %v602, %v604
    %v607 = vsel %vm605, %v604, %v602
    %s608 = scalar_lea.vmem %s10, 4
    %v609 = vld [vmem:[%s608] sm:$0x3]
    %v611 = vlaneseq
    %v612 = vshrl.u32 %v611, 7
    %v613 = vsub.s32 0, %v612
    %v614 = vrot.slane %v609, %v613
    %v615 = vlaneseq
    %v616 = vshrl.u32 %v615, 7
    %v617 = vsub.s32 1, %v616
    %v618 = vrot.slane %v609, %v617
    %v621 = vmul.f32 %v607, %v614
    %v622 = vmul.f32 %v606, %v618
    %623 = vrot.lane.b32.xlu0 %v557, 1
    %v624 = vpop.permute.xlu0 %623
    %625 = vrot.lane.b32.xlu0 %v558, 1
    %v626 = vpop.permute.xlu0 %625
    %vm627 = vcmp.lt.s32.totalorder %v310, 1
    %v628 = vsel %vm627, %v624, %v626
    %v629 = vsel %vm627, %v626, %v624
    %s630 = scalar_lea.vmem %s10, 6
    %v631 = vld [vmem:[%s630] sm:$0x3]
    %v633 = vlaneseq
    %v634 = vshrl.u32 %v633, 7
    %v635 = vsub.s32 0, %v634
    %v636 = vrot.slane %v631, %v635
    %v637 = vlaneseq
    %v638 = vshrl.u32 %v637, 7
    %v639 = vsub.s32 1, %v638
    %v640 = vrot.slane %v631, %v639
    %v643 = vmul.f32 %v629, %v636
    %v644 = vmul.f32 %v628, %v640
    %645 = vrot.lane.b32.xlu0 %v557, 127
    %v646 = vpop.permute.xlu0 %645
    %647 = vrot.lane.b32.xlu0 %v558, 127
    %v648 = vpop.permute.xlu0 %647
    %vm649 = vcmp.lt.s32.totalorder %v310, 127
    %v650 = vsel %vm649, %v646, %v648
    %v651 = vsel %vm649, %v648, %v646
    %s652 = scalar_lea.vmem %s10, 10
    %v653 = vld [vmem:[%s652] sm:$0x3]
    %v655 = vlaneseq
    %v656 = vshrl.u32 %v655, 7
    %v657 = vsub.s32 0, %v656
    %v658 = vrot.slane %v653, %v657
    %v659 = vlaneseq
    %v660 = vshrl.u32 %v659, 7
    %v661 = vsub.s32 1, %v660
    %v662 = vrot.slane %v653, %v661
    %v665 = vmul.f32 %v650, %v658
    %v666 = vmul.f32 %v651, %v662
    %667 = vrot.lane.b32.xlu0 %v557, 113
    %v668 = vpop.permute.xlu0 %667
    %669 = vrot.lane.b32.xlu0 %v558, 113
    %v670 = vpop.permute.xlu0 %669
    %vm671 = vcmp.lt.s32.totalorder %v310, 113
    %v672 = vsel %vm671, %v668, %v670
    %v673 = vsel %vm671, %v670, %v668
    %s674 = scalar_lea.vmem %s10, 12
    %v675 = vld [vmem:[%s674] sm:$0x3]
    %v677 = vlaneseq
    %v678 = vshrl.u32 %v677, 7
    %v679 = vsub.s32 0, %v678
    %v680 = vrot.slane %v675, %v679
    %v681 = vlaneseq
    %v682 = vshrl.u32 %v681, 7
    %v683 = vsub.s32 1, %v682
    %v684 = vrot.slane %v675, %v683
    %v687 = vmul.f32 %v672, %v680
    %v688 = vmul.f32 %v673, %v684
    %689 = vrot.lane.b32.xlu0 %v557, 112
    %v690 = vpop.permute.xlu0 %689
    %691 = vrot.lane.b32.xlu0 %v558, 112
    %v692 = vpop.permute.xlu0 %691
    %v693 = vsel %vm440, %v690, %v692
    %v694 = vsel %vm440, %v692, %v690
    %s695 = scalar_lea.vmem %s10, 14
    %v696 = vld [vmem:[%s695] sm:$0x3]
    %v698 = vlaneseq
    %v699 = vshrl.u32 %v698, 7
    %v700 = vsub.s32 0, %v699
    %v701 = vrot.slane %v696, %v700
    %v702 = vlaneseq
    %v703 = vshrl.u32 %v702, 7
    %v704 = vsub.s32 1, %v703
    %v705 = vrot.slane %v696, %v704
    %v708 = vmul.f32 %v693, %v701
    %v709 = vmul.f32 %v694, %v705
    %710 = vrot.lane.b32.xlu0 %v557, 111
    %v711 = vpop.permute.xlu0 %710
    %712 = vrot.lane.b32.xlu0 %v558, 111
    %v713 = vpop.permute.xlu0 %712
    %vm714 = vcmp.lt.s32.totalorder %v310, 111
    %v715 = vsel %vm714, %v711, %v713
    %v716 = vsel %vm714, %v713, %v711
    %s717 = scalar_lea.vmem %s10, 16
    %v718 = vld [vmem:[%s717] sm:$0x3]
    %v720 = vlaneseq
    %v721 = vshrl.u32 %v720, 7
    %v722 = vsub.s32 0, %v721
    %v723 = vrot.slane %v718, %v722
    %v724 = vlaneseq
    %v725 = vshrl.u32 %v724, 7
    %v726 = vsub.s32 1, %v725
    %v727 = vrot.slane %v718, %v726
    %v730 = vmul.f32 %v715, %v723
    %v731 = vmul.f32 %v716, %v727
    %v732 = vld [vmem:[%s6] sm:$0xff]
    %v733 = vld [vmem:[%s7] sm:$0xff]
    %735 = vset.pattern.permute.xlu0 0
    %736 = vperm.xlu0 %735, %v733
    %v737 = vpop.permute.xlu0 %736
    %vm739 = vcmask 588800
    %v741 = vsel %vm739, %v732, 0
    %743 = vmatprep.subr.mxu0 0.0
    %744 = vmatpush1.msra.mxu0 0.0
    %745 = vmatprep.subr.mxu0 0.0
    %746 = vmatpush1.msra.mxu0 0.0
    %747 = vmatprep.subr.mxu0 0.0
    %748 = vmatpush1.msra.mxu0 0.0
    %749 = vmatprep.subr.mxu0 0.0
    %750 = vmatpush1.msra.mxu0 0.0
    %751 = vmatprep.subr.mxu0 0.0
    %752 = vmatpush1.msra.mxu0 0.0
    %753 = vmatprep.subr.mxu0 0.0
    %754 = vmatpush1.msra.mxu0 0.0
    %755 = vmatprep.subr.mxu0 0.0
    %756 = vmatpush1.msra.mxu0 0.0
    %757 = vmatprep.subr.mxu0 %v731
    %758 = vmatpush1.msra.mxu0 %v730
    %759 = vmatprep.subr.mxu0 %v709
    %760 = vmatpush1.msra.mxu0 %v708
    %761 = vmatprep.subr.mxu0 %v688
    %762 = vmatpush1.msra.mxu0 %v687
    %763 = vmatprep.subr.mxu0 %v666
    %764 = vmatpush1.msra.mxu0 %v665
    %765 = vmatprep.subr.mxu0 %v558
    %766 = vmatpush1.msra.mxu0 %v557
    %767 = vmatprep.subr.mxu0 %v644
    %768 = vmatpush1.msra.mxu0 %v643
    %769 = vmatprep.subr.mxu0 %v622
    %770 = vmatpush1.msra.mxu0 %v621
    %771 = vmatprep.subr.mxu0 %v600
    %772 = vmatpush1.msra.mxu0 %v599
    %773 = vmatprep.subr.mxu0 %v579
    %774 = vmatpush1.msra.mxu0 %v578
    %775 = vmatprep.subr.mxu0 0.0
    %776 = vmatpush2.msra.mxu0 0.0
    %777 = vmatprep.subr.mxu0 0.0
    %778 = vmatpush2.msra.mxu0 0.0
    %779 = vmatprep.subr.mxu0 0.0
    %780 = vmatpush2.msra.mxu0 0.0
    %781 = vmatprep.subr.mxu0 0.0
    %782 = vmatpush2.msra.mxu0 0.0
    %783 = vmatprep.subr.mxu0 0.0
    %784 = vmatpush2.msra.mxu0 0.0
    %785 = vmatprep.subr.mxu0 0.0
    %786 = vmatpush2.msra.mxu0 0.0
    %787 = vmatprep.subr.mxu0 0.0
    %788 = vmatpush2.msra.mxu0 0.0
    %789 = vmatprep.subr.mxu0 0.0
    %790 = vmatpush2.msra.mxu0 0.0
    %791 = vmatprep.subr.mxu0 0.0
    %792 = vmatpush2.msra.mxu0 0.0
    %793 = vmatprep.subr.mxu0 0.0
    %794 = vmatpush2.msra.mxu0 0.0
    %795 = vmatprep.subr.mxu0 0.0
    %796 = vmatpush2.msra.mxu0 0.0
    %797 = vmatprep.subr.mxu0 0.0
    %798 = vmatpush2.msra.mxu0 0.0
    %799 = vmatprep.subr.mxu0 0.0
    %800 = vmatpush2.msra.mxu0 0.0
    %801 = vmatprep.subr.mxu0 0.0
    %802 = vmatpush2.msra.mxu0 0.0
    %803 = vmatprep.subr.mxu0 0.0
    %804 = vmatpush2.msra.mxu0 0.0
    %805 = vmatprep.subr.mxu0 0.0
    %806 = vmatpush2.msra.mxu0 0.0
    %807 = vmatprep.mubr.f32.mxu0 0.0
    %808 = vmatmul.mubr.f32.gmra.mxu0 %v741
    %v809 = vpop.f32.mrf.mxu0
    %v810 = vadd.f32 %v737, %v809
    %v811 = vpop.f32.mrf.mxu0
    %v812 = vadd.f32 %v737, %v811
    %813 = vdwg.mxu0
    %v814 = vmax.f32 %v810, 0.0
    %v815 = vmax.f32 %v812, 0.0
    %816 = vrot.lane.b32.xlu0 %v814, 17
    %v817 = vpop.permute.xlu0 %816
    %818 = vrot.lane.b32.xlu0 %v815, 17
    %v819 = vpop.permute.xlu0 %818
    %v820 = vsel %vm563, %v817, %v819
    %v821 = vsel %vm563, %v819, %v817
    %v822 = vmul.f32 %v821, %v571
    %v823 = vmul.f32 %v820, %v575
    %824 = vrot.lane.b32.xlu0 %v814, 16
    %v825 = vpop.permute.xlu0 %824
    %826 = vrot.lane.b32.xlu0 %v815, 16
    %v827 = vpop.permute.xlu0 %826
    %v828 = vsel %vm402, %v825, %v827
    %v829 = vsel %vm402, %v827, %v825
    %v830 = vmul.f32 %v829, %v592
    %v831 = vmul.f32 %v828, %v596
    %832 = vrot.lane.b32.xlu0 %v814, 15
    %v833 = vpop.permute.xlu0 %832
    %834 = vrot.lane.b32.xlu0 %v815, 15
    %v835 = vpop.permute.xlu0 %834
    %v836 = vsel %vm605, %v833, %v835
    %v837 = vsel %vm605, %v835, %v833
    %v838 = vmul.f32 %v837, %v614
    %v839 = vmul.f32 %v836, %v618
    %840 = vrot.lane.b32.xlu0 %v814, 1
    %v841 = vpop.permute.xlu0 %840
    %842 = vrot.lane.b32.xlu0 %v815, 1
    %v843 = vpop.permute.xlu0 %842
    %v844 = vsel %vm627, %v841, %v843
    %v845 = vsel %vm627, %v843, %v841
    %v846 = vmul.f32 %v845, %v636
    %v847 = vmul.f32 %v844, %v640
    %848 = vrot.lane.b32.xlu0 %v814, 127
    %v849 = vpop.permute.xlu0 %848
    %850 = vrot.lane.b32.xlu0 %v815, 127
    %v851 = vpop.permute.xlu0 %850
    %v852 = vsel %vm649, %v849, %v851
    %v853 = vsel %vm649, %v851, %v849
    %v854 = vmul.f32 %v852, %v658
    %v855 = vmul.f32 %v853, %v662
    %856 = vrot.lane.b32.xlu0 %v814, 113
    %v857 = vpop.permute.xlu0 %856
    %858 = vrot.lane.b32.xlu0 %v815, 113
    %v859 = vpop.permute.xlu0 %858
    %v860 = vsel %vm671, %v857, %v859
    %v861 = vsel %vm671, %v859, %v857
    %v862 = vmul.f32 %v860, %v680
    %v863 = vmul.f32 %v861, %v684
    %864 = vrot.lane.b32.xlu0 %v814, 112
    %v865 = vpop.permute.xlu0 %864
    %866 = vrot.lane.b32.xlu0 %v815, 112
    %v867 = vpop.permute.xlu0 %866
    %v868 = vsel %vm440, %v865, %v867
    %v869 = vsel %vm440, %v867, %v865
    %v870 = vmul.f32 %v868, %v701
    %v871 = vmul.f32 %v869, %v705
    %872 = vrot.lane.b32.xlu0 %v814, 111
    %v873 = vpop.permute.xlu0 %872
    %874 = vrot.lane.b32.xlu0 %v815, 111
    %v875 = vpop.permute.xlu0 %874
    %v876 = vsel %vm714, %v873, %v875
    %v877 = vsel %vm714, %v875, %v873
    %v878 = vmul.f32 %v876, %v723
    %v879 = vmul.f32 %v877, %v727
    %v880 = vld [vmem:[%s8] sm:$0xff]
    %v881 = vld [vmem:[%s9] sm:$0xff]
    %883 = vset.pattern.permute.xlu0 0
    %884 = vperm.xlu0 %883, %v881
    %v885 = vpop.permute.xlu0 %884
    %v888 = vsel %vm739, %v880, 0
    %890 = vmatprep.subr.mxu0 0.0
    %891 = vmatpush1.msra.mxu0 0.0
    %892 = vmatprep.subr.mxu0 0.0
    %893 = vmatpush1.msra.mxu0 0.0
    %894 = vmatprep.subr.mxu0 0.0
    %895 = vmatpush1.msra.mxu0 0.0
    %896 = vmatprep.subr.mxu0 0.0
    %897 = vmatpush1.msra.mxu0 0.0
    %898 = vmatprep.subr.mxu0 0.0
    %899 = vmatpush1.msra.mxu0 0.0
    %900 = vmatprep.subr.mxu0 0.0
    %901 = vmatpush1.msra.mxu0 0.0
    %902 = vmatprep.subr.mxu0 0.0
    %903 = vmatpush1.msra.mxu0 0.0
    %904 = vmatprep.subr.mxu0 %v879
    %905 = vmatpush1.msra.mxu0 %v878
    %906 = vmatprep.subr.mxu0 %v871
    %907 = vmatpush1.msra.mxu0 %v870
    %908 = vmatprep.subr.mxu0 %v863
    %909 = vmatpush1.msra.mxu0 %v862
    %910 = vmatprep.subr.mxu0 %v855
    %911 = vmatpush1.msra.mxu0 %v854
    %912 = vmatprep.subr.mxu0 %v815
    %913 = vmatpush1.msra.mxu0 %v814
    %914 = vmatprep.subr.mxu0 %v847
    %915 = vmatpush1.msra.mxu0 %v846
    %916 = vmatprep.subr.mxu0 %v839
    %917 = vmatpush1.msra.mxu0 %v838
    %918 = vmatprep.subr.mxu0 %v831
    %919 = vmatpush1.msra.mxu0 %v830
    %920 = vmatprep.subr.mxu0 %v823
    %921 = vmatpush1.msra.mxu0 %v822
    %922 = vmatprep.subr.mxu0 0.0
    %923 = vmatpush2.msra.mxu0 0.0
    %924 = vmatprep.subr.mxu0 0.0
    %925 = vmatpush2.msra.mxu0 0.0
    %926 = vmatprep.subr.mxu0 0.0
    %927 = vmatpush2.msra.mxu0 0.0
    %928 = vmatprep.subr.mxu0 0.0
    %929 = vmatpush2.msra.mxu0 0.0
    %930 = vmatprep.subr.mxu0 0.0
    %931 = vmatpush2.msra.mxu0 0.0
    %932 = vmatprep.subr.mxu0 0.0
    %933 = vmatpush2.msra.mxu0 0.0
    %934 = vmatprep.subr.mxu0 0.0
    %935 = vmatpush2.msra.mxu0 0.0
    %936 = vmatprep.subr.mxu0 0.0
    %937 = vmatpush2.msra.mxu0 0.0
    %938 = vmatprep.subr.mxu0 0.0
    %939 = vmatpush2.msra.mxu0 0.0
    %940 = vmatprep.subr.mxu0 0.0
    %941 = vmatpush2.msra.mxu0 0.0
    %942 = vmatprep.subr.mxu0 0.0
    %943 = vmatpush2.msra.mxu0 0.0
    %944 = vmatprep.subr.mxu0 0.0
    %945 = vmatpush2.msra.mxu0 0.0
    %946 = vmatprep.subr.mxu0 0.0
    %947 = vmatpush2.msra.mxu0 0.0
    %948 = vmatprep.subr.mxu0 0.0
    %949 = vmatpush2.msra.mxu0 0.0
    %950 = vmatprep.subr.mxu0 0.0
    %951 = vmatpush2.msra.mxu0 0.0
    %952 = vmatprep.subr.mxu0 0.0
    %953 = vmatpush2.msra.mxu0 0.0
    %954 = vmatprep.mubr.f32.mxu0 0.0
    %955 = vmatmul.mubr.f32.gmra.mxu0 %v888
    %v956 = vpop.f32.mrf.mxu0
    %v957 = vadd.f32 %v885, %v956
    %v958 = vpop.f32.mrf.mxu0
    %v959 = vadd.f32 %v885, %v958
    %960 = vdwg.mxu0
    %v961 = vmax.f32 %v957, 0.0
    %v962 = vmax.f32 %v959, 0.0
    %v963 = vpack.c.bf16 %v961, %v961
    %v964 = vpack.c.bf16 %v962, %v962
    %v965 = vld [vmem:[#allocation4] sm:$0xff]
    %v966 = vld [vmem:[#allocation4 + $0x8] sm:$0xff]
    %v967 = vld [vmem:[#allocation4 + $0x10] sm:$0xff]
    %v968 = vld [vmem:[#allocation4 + $0x18] sm:$0xff]
    %v969 = vld [vmem:[#allocation4 + $0x20] sm:$0xff]
    %v970 = vld [vmem:[#allocation4 + $0x28] sm:$0xff]
    %v971 = vld [vmem:[#allocation4 + $0x30] sm:$0xff]
    %v972 = vld [vmem:[#allocation4 + $0x38] sm:$0xff]
    %v973 = vld [vmem:[#allocation4 + $0x40] sm:$0xff]
    %v974 = vld [vmem:[#allocation4 + $0x48] sm:$0xff]
    %v975 = vld [vmem:[#allocation4 + $0x50] sm:$0xff]
    %v976 = vld [vmem:[#allocation4 + $0x58] sm:$0xff]
    %v977 = vld [vmem:[#allocation4 + $0x60] sm:$0xff]
    %v978 = vld [vmem:[#allocation4 + $0x68] sm:$0xff]
    %v979 = vld [vmem:[#allocation4 + $0x70] sm:$0xff]
    %v980 = vld [vmem:[#allocation4 + $0x78] sm:$0xff]
    %v981 = vld [vmem:[#allocation4 + $0x80] sm:$0xff]
    %v982 = vld [vmem:[#allocation4 + $0x88] sm:$0xff]
    %v983 = vld [vmem:[#allocation4 + $0x90] sm:$0xff]
    %v984 = vld [vmem:[#allocation4 + $0x98] sm:$0xff]
    %v985 = vld [vmem:[#allocation4 + $0xa0] sm:$0xff]
    %v986 = vld [vmem:[#allocation4 + $0xa8] sm:$0xff]
    %v987 = vld [vmem:[#allocation4 + $0xb0] sm:$0xff]
    %v988 = vld [vmem:[#allocation4 + $0xb8] sm:$0xff]
    %v989 = vld [vmem:[#allocation4 + $0xc0] sm:$0xff]
    %v990 = vld [vmem:[#allocation4 + $0xc8] sm:$0xff]
    %v991 = vld [vmem:[#allocation4 + $0xd0] sm:$0xff]
    %v992 = vld [vmem:[#allocation4 + $0xd8] sm:$0xff]
    %v993 = vld [vmem:[#allocation4 + $0xe0] sm:$0xff]
    %v994 = vld [vmem:[#allocation4 + $0xe8] sm:$0xff]
    %v995 = vld [vmem:[#allocation4 + $0xf0] sm:$0xff]
    %v996 = vld [vmem:[#allocation4 + $0xf8] sm:$0xff]
    %v1029 = vunpack.c.l.b16 %v965
    %v1030 = vunpack.c.h.b16 %v965
    %v1031 = vunpack.c.l.b16 %v966
    %v1032 = vunpack.c.h.b16 %v966
    %v1033 = vunpack.c.l.b16 %v967
    %v1034 = vunpack.c.h.b16 %v967
    %v1035 = vunpack.c.l.b16 %v968
    %v1036 = vunpack.c.h.b16 %v968
    %v1037 = vunpack.c.l.b16 %v969
    %v1038 = vunpack.c.h.b16 %v969
    %v1039 = vunpack.c.l.b16 %v970
    %v1040 = vunpack.c.h.b16 %v970
    %v1041 = vunpack.c.l.b16 %v971
    %v1042 = vunpack.c.h.b16 %v971
    %v1043 = vunpack.c.l.b16 %v972
    %v1044 = vunpack.c.h.b16 %v972
    %v1045 = vunpack.c.l.b16 %v973
    %v1046 = vunpack.c.h.b16 %v973
    %v1047 = vunpack.c.l.b16 %v974
    %v1048 = vunpack.c.h.b16 %v974
    %v1049 = vunpack.c.l.b16 %v975
    %v1050 = vunpack.c.h.b16 %v975
    %v1051 = vunpack.c.l.b16 %v976
    %v1052 = vunpack.c.h.b16 %v976
    %v1053 = vunpack.c.l.b16 %v977
    %v1054 = vunpack.c.h.b16 %v977
    %v1055 = vunpack.c.l.b16 %v978
    %v1056 = vunpack.c.h.b16 %v978
    %v1057 = vunpack.c.l.b16 %v979
    %v1058 = vunpack.c.h.b16 %v979
    %v1059 = vunpack.c.l.b16 %v980
    %v1060 = vunpack.c.h.b16 %v980
    %v1061 = vunpack.c.l.b16 %v981
    %v1062 = vunpack.c.h.b16 %v981
    %v1063 = vunpack.c.l.b16 %v982
    %v1064 = vunpack.c.h.b16 %v982
    %v1065 = vunpack.c.l.b16 %v983
    %v1066 = vunpack.c.h.b16 %v983
    %v1067 = vunpack.c.l.b16 %v984
    %v1068 = vunpack.c.h.b16 %v984
    %v1069 = vunpack.c.l.b16 %v985
    %v1070 = vunpack.c.h.b16 %v985
    %v1071 = vunpack.c.l.b16 %v986
    %v1072 = vunpack.c.h.b16 %v986
    %v1073 = vunpack.c.l.b16 %v987
    %v1074 = vunpack.c.h.b16 %v987
    %v1075 = vunpack.c.l.b16 %v988
    %v1076 = vunpack.c.h.b16 %v988
    %v1077 = vunpack.c.l.b16 %v989
    %v1078 = vunpack.c.h.b16 %v989
    %v1079 = vunpack.c.l.b16 %v990
    %v1080 = vunpack.c.h.b16 %v990
    %v1081 = vunpack.c.l.b16 %v991
    %v1082 = vunpack.c.h.b16 %v991
    %v1083 = vunpack.c.l.b16 %v992
    %v1084 = vunpack.c.h.b16 %v992
    %v1085 = vunpack.c.l.b16 %v993
    %v1086 = vunpack.c.h.b16 %v993
    %v1087 = vunpack.c.l.b16 %v994
    %v1088 = vunpack.c.h.b16 %v994
    %v1089 = vunpack.c.l.b16 %v995
    %v1090 = vunpack.c.h.b16 %v995
    %v1091 = vunpack.c.l.b16 %v996
    %v1092 = vunpack.c.h.b16 %v996
    %v1093 = vpack.c.b16 %v1031, %v1029
    %v1094 = vpack.c.b16 %v1032, %v1030
    %v1095 = vpack.c.b16 %v1035, %v1033
    %v1096 = vpack.c.b16 %v1036, %v1034
    %v1097 = vpack.c.b16 %v1039, %v1037
    %v1098 = vpack.c.b16 %v1040, %v1038
    %v1099 = vpack.c.b16 %v1043, %v1041
    %v1100 = vpack.c.b16 %v1044, %v1042
    %v1101 = vpack.c.b16 %v1047, %v1045
    %v1102 = vpack.c.b16 %v1048, %v1046
    %v1103 = vpack.c.b16 %v1051, %v1049
    %v1104 = vpack.c.b16 %v1052, %v1050
    %v1105 = vpack.c.b16 %v1055, %v1053
    %v1106 = vpack.c.b16 %v1056, %v1054
    %v1107 = vpack.c.b16 %v1059, %v1057
    %v1108 = vpack.c.b16 %v1060, %v1058
    %v1109 = vpack.c.b16 %v1063, %v1061
    %v1110 = vpack.c.b16 %v1064, %v1062
    %v1111 = vpack.c.b16 %v1067, %v1065
    %v1112 = vpack.c.b16 %v1068, %v1066
    %v1113 = vpack.c.b16 %v1071, %v1069
    %v1114 = vpack.c.b16 %v1072, %v1070
    %v1115 = vpack.c.b16 %v1075, %v1073
    %v1116 = vpack.c.b16 %v1076, %v1074
    %v1117 = vpack.c.b16 %v1079, %v1077
    %v1118 = vpack.c.b16 %v1080, %v1078
    %v1119 = vpack.c.b16 %v1083, %v1081
    %v1120 = vpack.c.b16 %v1084, %v1082
    %v1121 = vpack.c.b16 %v1087, %v1085
    %v1122 = vpack.c.b16 %v1088, %v1086
    %v1123 = vpack.c.b16 %v1091, %v1089
    %v1124 = vpack.c.b16 %v1092, %v1090
    %1157 = vmatprep.subr.bf16.mxu0 %v1108
    %1158 = vmatpush1.bf16.msra.mxu0 %v1107
    %1159 = vmatprep.subr.bf16.mxu0 %v1106
    %1160 = vmatpush1.bf16.msra.mxu0 %v1105
    %1161 = vmatprep.subr.bf16.mxu0 %v1104
    %1162 = vmatpush1.bf16.msra.mxu0 %v1103
    %1163 = vmatprep.subr.bf16.mxu0 %v1102
    %1164 = vmatpush1.bf16.msra.mxu0 %v1101
    %1165 = vmatprep.subr.bf16.mxu0 %v1100
    %1166 = vmatpush1.bf16.msra.mxu0 %v1099
    %1167 = vmatprep.subr.bf16.mxu0 %v1098
    %1168 = vmatpush1.bf16.msra.mxu0 %v1097
    %1169 = vmatprep.subr.bf16.mxu0 %v1096
    %1170 = vmatpush1.bf16.msra.mxu0 %v1095
    %1171 = vmatprep.subr.bf16.mxu0 %v1094
    %1172 = vmatpush1.bf16.msra.mxu0 %v1093
    %1173 = vmatprep.subr.bf16.mxu0 %v1124
    %1174 = vmatpush2.bf16.msra.mxu0 %v1123
    %1175 = vmatprep.subr.bf16.mxu0 %v1122
    %1176 = vmatpush2.bf16.msra.mxu0 %v1121
    %1177 = vmatprep.subr.bf16.mxu0 %v1120
    %1178 = vmatpush2.bf16.msra.mxu0 %v1119
    %1179 = vmatprep.subr.bf16.mxu0 %v1118
    %1180 = vmatpush2.bf16.msra.mxu0 %v1117
    %1181 = vmatprep.subr.bf16.mxu0 %v1116
    %1182 = vmatpush2.bf16.msra.mxu0 %v1115
    %1183 = vmatprep.subr.bf16.mxu0 %v1114
    %1184 = vmatpush2.bf16.msra.mxu0 %v1113
    %1185 = vmatprep.subr.bf16.mxu0 %v1112
    %1186 = vmatpush2.bf16.msra.mxu0 %v1111
    %1187 = vmatprep.subr.bf16.mxu0 %v1110
    %1188 = vmatpush2.bf16.msra.mxu0 %v1109
    %1189 = vmatprep.mubr.bf16.mxu0 %v964
    %1190 = vmatmul.mubr.bf16.gmra.mxu0 %v963
    %v1191 = vpop.f32.mrf.mxu0
    %v1192 = vadd.f32 0.0, %v1191
    %v1193 = vpop.f32.mrf.mxu0
    %v1194 = vadd.f32 0.0, %v1193
    %v1195 = vpop.f32.mrf.mxu0
    %v1196 = vpop.f32.mrf.mxu0
    %1197 = vdwg.mxu0
    %1198 = vst [vmem:[%s11] sm:$0xff] %v1192
    %1199 = vst [vmem:[%s11 + $0x8] sm:$0xff] %v1194
    // Predicated region
    $region54: #{forward.1} parent=1 // pred_check
      _
    $region55: #{forward.1} parent=1 // pred_check_branch
      %1201 = sbr.rel (0) target = $region57
    $region56: #{forward.1} parent=1 // pred_region
      _
    $region57: #{forward.1} parent=1 // pred_fallthru
      _
    // Predicated region
    $region58: #{forward.1} parent=1 // pred_check
      _
    $region59: #{forward.1} parent=1 // pred_check_branch
      %1203 = sbr.rel (0) target = $region61
    $region60: #{forward.1} parent=1 // pred_region
      _
    $region61: #{forward.1} parent=1 // pred_fallthru
      _
    %1204 = vsyncpa [#allocation3], 1
    %1205 = vsyncpa [#allocation5], 1

</llo_original>
